<compile_context>
chip_gen: v5e
topology: v5e:2x2
jax: 0.10.0
libtpu: 0.0.40
codegen_flags: <defaults>
</compile_context>

<pallas_src>
import jax
import jax.numpy as jnp
from jax.experimental import pallas as pl
from jax.experimental.pallas import tpu as pltpu


def _lstm_fc_kernel(x_ref, wih_ref, whh_ref, b_ref, wfc_ref, bfc_ref, out_ref):
    """Full recurrence over time in one kernel invocation (no grid).

    Shapes (all VMEM-resident, < 300 KiB total):
      x_ref   : (Bp, S)    f32   batch on sublanes, time on lanes
      wih_ref : (1, 4H)    f32   W_ih^T  (input_size == 1)
      whh_ref : (H, 4H)    bf16  W_hh^T
      b_ref   : (1, 4H)    f32   b_ih + b_hh (fused)
      wfc_ref : (H, Op)    bf16  W_fc^T, lane-padded (Op = 128*ceil(O/128))
      bfc_ref : (1, Op)    f32
      out_ref : (Bp, Op)   f32
    """
    Bp, S = x_ref.shape
    H = whh_ref.shape[0]

    xv = x_ref[...]            # single (partially masked) vreg load, done once
    wih = wih_ref[...]         # (1, 4H)  f32
    bias = b_ref[...]          # (1, 4H)  f32
    whh = whh_ref[...]         # (H, 4H)  bf16, hoisted out of the loop

    h = jnp.zeros((Bp, H), jnp.float32)
    c = jnp.zeros((Bp, H), jnp.float32)

    # Fully unrolled recurrence (S is small and static).
    for t in range(S):
        # Fused per-step rank-1 input projection (+ bias): pure VPU work that
        # overlaps with the previous step's MXU matmul.
        proj = xv[:, t:t + 1] * wih + bias                         # (Bp, 4H) f32
        # bf16 operands, f32 accumulation -> single-pass MXU matmul.
        gates = proj + jnp.dot(h.astype(jnp.bfloat16), whh,
                               preferred_element_type=jnp.float32)  # (Bp, 4H)
        # Gate order matches PyTorch: i, f, g, o.  i/f sigmoids fused.
        if_g = jax.nn.sigmoid(gates[:, :2 * H])
        i_g = if_g[:, :H]
        f_g = if_g[:, H:]
        g_g = jnp.tanh(gates[:, 2 * H:3 * H])
        o_g = jax.nn.sigmoid(gates[:, 3 * H:])
        c = f_g * c + i_g * g_g
        h = o_g * jnp.tanh(c)

    # Linear head on last-timestep hidden state (lane-padded, unmasked store).
    out_ref[...] = (jnp.dot(h.astype(jnp.bfloat16), wfc_ref[...],
                            preferred_element_type=jnp.float32)
                    + bfc_ref[...])


def prepare_params(params):
    """One-time weight prep: transposes, bias fusion, bf16 casts, lane padding."""
    w_ih, w_hh, b_ih, b_hh, w_fc, b_fc = params
    H = w_hh.shape[1]
    I = w_ih.shape[1]
    O = w_fc.shape[0]
    assert I == 1, "kernel specialized to input_size == 1 (module default)"
    Op = -(-O // 128) * 128                        # pad head output to full lanes

    wih_t = jnp.transpose(w_ih).astype(jnp.float32)           # (1, 4H)
    whh_bf = jnp.transpose(w_hh).astype(jnp.bfloat16)         # (H, 4H) bf16
    b = (b_ih + b_hh).reshape(1, 4 * H).astype(jnp.float32)   # fused bias
    wfc_p = jnp.zeros((H, Op), jnp.bfloat16).at[:, :O].set(
        jnp.transpose(w_fc).astype(jnp.bfloat16))
    bfc_p = jnp.zeros((1, Op), jnp.float32).at[:, :O].set(b_fc.reshape(1, O))
    return (wih_t, whh_bf, b, wfc_p, bfc_p, O)


def lstm_fc_forward(x, prepared):
    """x: (B, S, 1) float32, batch-first like the PyTorch module."""
    wih_t, whh_bf, b, wfc_p, bfc_p, O = prepared
    B, S, I = x.shape
    assert I == 1
    H = whh_bf.shape[0]
    Op = wfc_p.shape[1]

    # Squeeze the I=1 dim and pad batch to a full 8-sublane tile: (Bp, S).
    Bp = -(-B // 8) * 8
    x2 = x[..., 0]                                             # (B, S)
    if Bp != B:
        x2 = jnp.pad(x2, ((0, Bp - B), (0, 0)))                # zero rows

    vmem = pl.BlockSpec(memory_space=pltpu.MemorySpace.VMEM)
    out = pl.pallas_call(
        _lstm_fc_kernel,
        out_shape=jax.ShapeDtypeStruct((Bp, Op), jnp.float32),
        in_specs=[vmem] * 6,
        out_specs=vmem,
    )(x2, wih_t, whh_bf, b, wfc_p, bfc_p)
    return out[:B, :O]


def _reference_forward(x, params):
    """Pure-JAX f32 reference reproducing torch.nn.LSTM + Linear semantics."""
    w_ih, w_hh, b_ih, b_hh, w_fc, b_fc = params
    B, S, I = x.shape
    H = w_hh.shape[1]

    def cell(carry, x_t):
        h, c = carry
        gates = x_t @ w_ih.T + b_ih + h @ w_hh.T + b_hh
        i_g = jax.nn.sigmoid(gates[:, 0 * H:1 * H])
        f_g = jax.nn.sigmoid(gates[:, 1 * H:2 * H])
        g_g = jnp.tanh(gates[:, 2 * H:3 * H])
        o_g = jax.nn.sigmoid(gates[:, 3 * H:4 * H])
        c_new = f_g * c + i_g * g_g
        h_new = o_g * jnp.tanh(c_new)
        return (h_new, c_new), None

    h0 = jnp.zeros((B, H), jnp.float32)
    c0 = jnp.zeros((B, H), jnp.float32)
    (h_last, _), _ = jax.lax.scan(cell, (h0, c0), jnp.transpose(x, (1, 0, 2)))
    return h_last @ w_fc.T + b_fc


def init_params(key, input_size=1, hidden_size=128, output_size=1):
    """Deterministic init mimicking PyTorch's U(-1/sqrt(H), 1/sqrt(H))."""
    k = 1.0 / jnp.sqrt(jnp.float32(hidden_size))
    ks = jax.random.split(key, 6)
    u = lambda kk, shape: jax.random.uniform(kk, shape, jnp.float32, -k, k)
    w_ih = u(ks[0], (4 * hidden_size, input_size))
    w_hh = u(ks[1], (4 * hidden_size, hidden_size))
    b_ih = u(ks[2], (4 * hidden_size,))
    b_hh = u(ks[3], (4 * hidden_size,))
    w_fc = u(ks[4], (output_size, hidden_size))
    b_fc = u(ks[5], (output_size,))
    return (w_ih, w_hh, b_ih, b_hh, w_fc, b_fc)


if __name__ == "__main__":
    key = jax.random.PRNGKey(0)
    k_param, k_x = jax.random.split(key)

    B, S, I, H, O = 4, 8, 1, 128, 1
    params = init_params(k_param, input_size=I, hidden_size=H, output_size=O)
    x = jax.random.normal(k_x, (B, S, I), dtype=jnp.float32)

    prepared = prepare_params(params)     # one-time weight prep (not per call)
    y = lstm_fc_forward(x, prepared)
    y = jax.block_until_ready(y)

    y_ref = _reference_forward(x, params)
    assert y.shape == (B, O)
    # bf16-operand recurrence vs. f32 reference: relaxed tolerance.
    assert jnp.allclose(y, y_ref, atol=5e-2, rtol=5e-2), (y, y_ref)

    print("KERNEL_OK")
</pallas_src>

<mosaic_0001>
module attributes {stable_mosaic.version = 11 : i64} {
  func.func @_lstm_fc_kernel(%arg0: memref<8x8xf32, #tpu.memory_space<vmem>>, %arg1: memref<1x512xf32, #tpu.memory_space<vmem>>, %arg2: memref<128x512xbf16, #tpu.memory_space<vmem>>, %arg3: memref<1x512xf32, #tpu.memory_space<vmem>>, %arg4: memref<128x128xbf16, #tpu.memory_space<vmem>>, %arg5: memref<1x128xf32, #tpu.memory_space<vmem>>, %arg6: memref<8x128xf32, #tpu.memory_space<vmem>>) attributes {dimension_semantics = [], scalar_prefetch = 0 : i64, scratch_operands = 0 : i64, tpu.core_type = #tpu.core_type<tc>} {
    %c0 = arith.constant 0 : index
    %c0_0 = arith.constant 0 : index
    %0 = vector.load %arg0[%c0, %c0_0] : memref<8x8xf32, #tpu.memory_space<vmem>>, vector<8x8xf32>
    %c0_1 = arith.constant 0 : index
    %c0_2 = arith.constant 0 : index
    %1 = vector.load %arg1[%c0_1, %c0_2] : memref<1x512xf32, #tpu.memory_space<vmem>>, vector<1x512xf32>
    %c0_3 = arith.constant 0 : index
    %c0_4 = arith.constant 0 : index
    %2 = vector.load %arg3[%c0_3, %c0_4] : memref<1x512xf32, #tpu.memory_space<vmem>>, vector<1x512xf32>
    %c0_5 = arith.constant 0 : index
    %c0_6 = arith.constant 0 : index
    %3 = vector.load %arg2[%c0_5, %c0_6] : memref<128x512xbf16, #tpu.memory_space<vmem>>, vector<128x512xbf16>
    %cst = arith.constant 0.000000e+00 : f32
    %4 = vector.broadcast %cst : f32 to vector<8x128xf32>
    %cst_7 = arith.constant 0.000000e+00 : f32
    %5 = vector.broadcast %cst_7 : f32 to vector<8x128xf32>
    %6 = vector.extract_strided_slice %0 {offsets = [0, 0], sizes = [8, 1], strides = [1, 1]} : vector<8x8xf32> to vector<8x1xf32>
    %7 = vector.broadcast %6 : vector<8x1xf32> to vector<8x512xf32>
    %8 = vector.broadcast %1 : vector<1x512xf32> to vector<8x512xf32>
    %9 = arith.mulf %7, %8 : vector<8x512xf32>
    %10 = vector.broadcast %2 : vector<1x512xf32> to vector<8x512xf32>
    %11 = arith.addf %9, %10 : vector<8x512xf32>
    %12 = arith.truncf %4 : vector<8x128xf32> to vector<8x128xbf16>
    %cst_8 = arith.constant dense<0.000000e+00> : vector<8x512xf32>
    %13 = tpu.matmul %12, %3, %cst_8 {dimension_numbers = #tpu.dot_dimension_numbers<[1], [0], [0], [1], [0, 0, 1, 1], [], []>} : vector<8x128xbf16>, vector<128x512xbf16>, vector<8x512xf32> -> vector<8x512xf32>
    %14 = arith.addf %11, %13 : vector<8x512xf32>
    %15 = vector.extract_strided_slice %14 {offsets = [0, 0], sizes = [8, 256], strides = [1, 1]} : vector<8x512xf32> to vector<8x256xf32>
    %16 = arith.negf %15 : vector<8x256xf32>
    %17 = math.exp %16 : vector<8x256xf32>
    %cst_9 = arith.constant 1.000000e+00 : f32
    %18 = vector.broadcast %cst_9 : f32 to vector<8x256xf32>
    %19 = arith.addf %18, %17 : vector<8x256xf32>
    %20 = arith.divf %18, %19 : vector<8x256xf32>
    %21 = vector.extract_strided_slice %20 {offsets = [0, 0], sizes = [8, 128], strides = [1, 1]} : vector<8x256xf32> to vector<8x128xf32>
    %22 = vector.extract_strided_slice %20 {offsets = [0, 128], sizes = [8, 128], strides = [1, 1]} : vector<8x256xf32> to vector<8x128xf32>
    %23 = vector.extract_strided_slice %14 {offsets = [0, 256], sizes = [8, 128], strides = [1, 1]} : vector<8x512xf32> to vector<8x128xf32>
    %24 = math.tanh %23 : vector<8x128xf32>
    %25 = vector.extract_strided_slice %14 {offsets = [0, 384], sizes = [8, 128], strides = [1, 1]} : vector<8x512xf32> to vector<8x128xf32>
    %26 = arith.negf %25 : vector<8x128xf32>
    %27 = math.exp %26 : vector<8x128xf32>
    %cst_10 = arith.constant 1.000000e+00 : f32
    %28 = vector.broadcast %cst_10 : f32 to vector<8x128xf32>
    %29 = arith.addf %28, %27 : vector<8x128xf32>
    %30 = arith.divf %28, %29 : vector<8x128xf32>
    %31 = arith.mulf %22, %5 : vector<8x128xf32>
    %32 = arith.mulf %21, %24 : vector<8x128xf32>
    %33 = arith.addf %31, %32 : vector<8x128xf32>
    %34 = math.tanh %33 : vector<8x128xf32>
    %35 = arith.mulf %30, %34 : vector<8x128xf32>
    %36 = vector.extract_strided_slice %0 {offsets = [0, 1], sizes = [8, 1], strides = [1, 1]} : vector<8x8xf32> to vector<8x1xf32>
    %37 = vector.broadcast %36 : vector<8x1xf32> to vector<8x512xf32>
    %38 = vector.broadcast %1 : vector<1x512xf32> to vector<8x512xf32>
    %39 = arith.mulf %37, %38 : vector<8x512xf32>
    %40 = vector.broadcast %2 : vector<1x512xf32> to vector<8x512xf32>
    %41 = arith.addf %39, %40 : vector<8x512xf32>
    %42 = arith.truncf %35 : vector<8x128xf32> to vector<8x128xbf16>
    %cst_11 = arith.constant dense<0.000000e+00> : vector<8x512xf32>
    %43 = tpu.matmul %42, %3, %cst_11 {dimension_numbers = #tpu.dot_dimension_numbers<[1], [0], [0], [1], [0, 0, 1, 1], [], []>} : vector<8x128xbf16>, vector<128x512xbf16>, vector<8x512xf32> -> vector<8x512xf32>
    %44 = arith.addf %41, %43 : vector<8x512xf32>
    %45 = vector.extract_strided_slice %44 {offsets = [0, 0], sizes = [8, 256], strides = [1, 1]} : vector<8x512xf32> to vector<8x256xf32>
    %46 = arith.negf %45 : vector<8x256xf32>
    %47 = math.exp %46 : vector<8x256xf32>
    %cst_12 = arith.constant 1.000000e+00 : f32
    %48 = vector.broadcast %cst_12 : f32 to vector<8x256xf32>
    %49 = arith.addf %48, %47 : vector<8x256xf32>
    %50 = arith.divf %48, %49 : vector<8x256xf32>
    %51 = vector.extract_strided_slice %50 {offsets = [0, 0], sizes = [8, 128], strides = [1, 1]} : vector<8x256xf32> to vector<8x128xf32>
    %52 = vector.extract_strided_slice %50 {offsets = [0, 128], sizes = [8, 128], strides = [1, 1]} : vector<8x256xf32> to vector<8x128xf32>
    %53 = vector.extract_strided_slice %44 {offsets = [0, 256], sizes = [8, 128], strides = [1, 1]} : vector<8x512xf32> to vector<8x128xf32>
    %54 = math.tanh %53 : vector<8x128xf32>
    %55 = vector.extract_strided_slice %44 {offsets = [0, 384], sizes = [8, 128], strides = [1, 1]} : vector<8x512xf32> to vector<8x128xf32>
    %56 = arith.negf %55 : vector<8x128xf32>
    %57 = math.exp %56 : vector<8x128xf32>
    %cst_13 = arith.constant 1.000000e+00 : f32
    %58 = vector.broadcast %cst_13 : f32 to vector<8x128xf32>
    %59 = arith.addf %58, %57 : vector<8x128xf32>
    %60 = arith.divf %58, %59 : vector<8x128xf32>
    %61 = arith.mulf %52, %33 : vector<8x128xf32>
    %62 = arith.mulf %51, %54 : vector<8x128xf32>
    %63 = arith.addf %61, %62 : vector<8x128xf32>
    %64 = math.tanh %63 : vector<8x128xf32>
    %65 = arith.mulf %60, %64 : vector<8x128xf32>
    %66 = vector.extract_strided_slice %0 {offsets = [0, 2], sizes = [8, 1], strides = [1, 1]} : vector<8x8xf32> to vector<8x1xf32>
    %67 = vector.broadcast %66 : vector<8x1xf32> to vector<8x512xf32>
    %68 = vector.broadcast %1 : vector<1x512xf32> to vector<8x512xf32>
    %69 = arith.mulf %67, %68 : vector<8x512xf32>
    %70 = vector.broadcast %2 : vector<1x512xf32> to vector<8x512xf32>
    %71 = arith.addf %69, %70 : vector<8x512xf32>
    %72 = arith.truncf %65 : vector<8x128xf32> to vector<8x128xbf16>
    %cst_14 = arith.constant dense<0.000000e+00> : vector<8x512xf32>
    %73 = tpu.matmul %72, %3, %cst_14 {dimension_numbers = #tpu.dot_dimension_numbers<[1], [0], [0], [1], [0, 0, 1, 1], [], []>} : vector<8x128xbf16>, vector<128x512xbf16>, vector<8x512xf32> -> vector<8x512xf32>
    %74 = arith.addf %71, %73 : vector<8x512xf32>
    %75 = vector.extract_strided_slice %74 {offsets = [0, 0], sizes = [8, 256], strides = [1, 1]} : vector<8x512xf32> to vector<8x256xf32>
    %76 = arith.negf %75 : vector<8x256xf32>
    %77 = math.exp %76 : vector<8x256xf32>
    %cst_15 = arith.constant 1.000000e+00 : f32
    %78 = vector.broadcast %cst_15 : f32 to vector<8x256xf32>
    %79 = arith.addf %78, %77 : vector<8x256xf32>
    %80 = arith.divf %78, %79 : vector<8x256xf32>
    %81 = vector.extract_strided_slice %80 {offsets = [0, 0], sizes = [8, 128], strides = [1, 1]} : vector<8x256xf32> to vector<8x128xf32>
    %82 = vector.extract_strided_slice %80 {offsets = [0, 128], sizes = [8, 128], strides = [1, 1]} : vector<8x256xf32> to vector<8x128xf32>
    %83 = vector.extract_strided_slice %74 {offsets = [0, 256], sizes = [8, 128], strides = [1, 1]} : vector<8x512xf32> to vector<8x128xf32>
    %84 = math.tanh %83 : vector<8x128xf32>
    %85 = vector.extract_strided_slice %74 {offsets = [0, 384], sizes = [8, 128], strides = [1, 1]} : vector<8x512xf32> to vector<8x128xf32>
    %86 = arith.negf %85 : vector<8x128xf32>
    %87 = math.exp %86 : vector<8x128xf32>
    %cst_16 = arith.constant 1.000000e+00 : f32
    %88 = vector.broadcast %cst_16 : f32 to vector<8x128xf32>
    %89 = arith.addf %88, %87 : vector<8x128xf32>
    %90 = arith.divf %88, %89 : vector<8x128xf32>
    %91 = arith.mulf %82, %63 : vector<8x128xf32>
    %92 = arith.mulf %81, %84 : vector<8x128xf32>
    %93 = arith.addf %91, %92 : vector<8x128xf32>
    %94 = math.tanh %93 : vector<8x128xf32>
    %95 = arith.mulf %90, %94 : vector<8x128xf32>
    %96 = vector.extract_strided_slice %0 {offsets = [0, 3], sizes = [8, 1], strides = [1, 1]} : vector<8x8xf32> to vector<8x1xf32>
    %97 = vector.broadcast %96 : vector<8x1xf32> to vector<8x512xf32>
    %98 = vector.broadcast %1 : vector<1x512xf32> to vector<8x512xf32>
    %99 = arith.mulf %97, %98 : vector<8x512xf32>
    %100 = vector.broadcast %2 : vector<1x512xf32> to vector<8x512xf32>
    %101 = arith.addf %99, %100 : vector<8x512xf32>
    %102 = arith.truncf %95 : vector<8x128xf32> to vector<8x128xbf16>
    %cst_17 = arith.constant dense<0.000000e+00> : vector<8x512xf32>
    %103 = tpu.matmul %102, %3, %cst_17 {dimension_numbers = #tpu.dot_dimension_numbers<[1], [0], [0], [1], [0, 0, 1, 1], [], []>} : vector<8x128xbf16>, vector<128x512xbf16>, vector<8x512xf32> -> vector<8x512xf32>
    %104 = arith.addf %101, %103 : vector<8x512xf32>
    %105 = vector.extract_strided_slice %104 {offsets = [0, 0], sizes = [8, 256], strides = [1, 1]} : vector<8x512xf32> to vector<8x256xf32>
    %106 = arith.negf %105 : vector<8x256xf32>
    %107 = math.exp %106 : vector<8x256xf32>
    %cst_18 = arith.constant 1.000000e+00 : f32
    %108 = vector.broadcast %cst_18 : f32 to vector<8x256xf32>
    %109 = arith.addf %108, %107 : vector<8x256xf32>
    %110 = arith.divf %108, %109 : vector<8x256xf32>
    %111 = vector.extract_strided_slice %110 {offsets = [0, 0], sizes = [8, 128], strides = [1, 1]} : vector<8x256xf32> to vector<8x128xf32>
    %112 = vector.extract_strided_slice %110 {offsets = [0, 128], sizes = [8, 128], strides = [1, 1]} : vector<8x256xf32> to vector<8x128xf32>
    %113 = vector.extract_strided_slice %104 {offsets = [0, 256], sizes = [8, 128], strides = [1, 1]} : vector<8x512xf32> to vector<8x128xf32>
    %114 = math.tanh %113 : vector<8x128xf32>
    %115 = vector.extract_strided_slice %104 {offsets = [0, 384], sizes = [8, 128], strides = [1, 1]} : vector<8x512xf32> to vector<8x128xf32>
    %116 = arith.negf %115 : vector<8x128xf32>
    %117 = math.exp %116 : vector<8x128xf32>
    %cst_19 = arith.constant 1.000000e+00 : f32
    %118 = vector.broadcast %cst_19 : f32 to vector<8x128xf32>
    %119 = arith.addf %118, %117 : vector<8x128xf32>
    %120 = arith.divf %118, %119 : vector<8x128xf32>
    %121 = arith.mulf %112, %93 : vector<8x128xf32>
    %122 = arith.mulf %111, %114 : vector<8x128xf32>
    %123 = arith.addf %121, %122 : vector<8x128xf32>
    %124 = math.tanh %123 : vector<8x128xf32>
    %125 = arith.mulf %120, %124 : vector<8x128xf32>
    %126 = vector.extract_strided_slice %0 {offsets = [0, 4], sizes = [8, 1], strides = [1, 1]} : vector<8x8xf32> to vector<8x1xf32>
    %127 = vector.broadcast %126 : vector<8x1xf32> to vector<8x512xf32>
    %128 = vector.broadcast %1 : vector<1x512xf32> to vector<8x512xf32>
    %129 = arith.mulf %127, %128 : vector<8x512xf32>
    %130 = vector.broadcast %2 : vector<1x512xf32> to vector<8x512xf32>
    %131 = arith.addf %129, %130 : vector<8x512xf32>
    %132 = arith.truncf %125 : vector<8x128xf32> to vector<8x128xbf16>
    %cst_20 = arith.constant dense<0.000000e+00> : vector<8x512xf32>
    %133 = tpu.matmul %132, %3, %cst_20 {dimension_numbers = #tpu.dot_dimension_numbers<[1], [0], [0], [1], [0, 0, 1, 1], [], []>} : vector<8x128xbf16>, vector<128x512xbf16>, vector<8x512xf32> -> vector<8x512xf32>
    %134 = arith.addf %131, %133 : vector<8x512xf32>
    %135 = vector.extract_strided_slice %134 {offsets = [0, 0], sizes = [8, 256], strides = [1, 1]} : vector<8x512xf32> to vector<8x256xf32>
    %136 = arith.negf %135 : vector<8x256xf32>
    %137 = math.exp %136 : vector<8x256xf32>
    %cst_21 = arith.constant 1.000000e+00 : f32
    %138 = vector.broadcast %cst_21 : f32 to vector<8x256xf32>
    %139 = arith.addf %138, %137 : vector<8x256xf32>
    %140 = arith.divf %138, %139 : vector<8x256xf32>
    %141 = vector.extract_strided_slice %140 {offsets = [0, 0], sizes = [8, 128], strides = [1, 1]} : vector<8x256xf32> to vector<8x128xf32>
    %142 = vector.extract_strided_slice %140 {offsets = [0, 128], sizes = [8, 128], strides = [1, 1]} : vector<8x256xf32> to vector<8x128xf32>
    %143 = vector.extract_strided_slice %134 {offsets = [0, 256], sizes = [8, 128], strides = [1, 1]} : vector<8x512xf32> to vector<8x128xf32>
    %144 = math.tanh %143 : vector<8x128xf32>
    %145 = vector.extract_strided_slice %134 {offsets = [0, 384], sizes = [8, 128], strides = [1, 1]} : vector<8x512xf32> to vector<8x128xf32>
    %146 = arith.negf %145 : vector<8x128xf32>
    %147 = math.exp %146 : vector<8x128xf32>
    %cst_22 = arith.constant 1.000000e+00 : f32
    %148 = vector.broadcast %cst_22 : f32 to vector<8x128xf32>
    %149 = arith.addf %148, %147 : vector<8x128xf32>
    %150 = arith.divf %148, %149 : vector<8x128xf32>
    %151 = arith.mulf %142, %123 : vector<8x128xf32>
    %152 = arith.mulf %141, %144 : vector<8x128xf32>
    %153 = arith.addf %151, %152 : vector<8x128xf32>
    %154 = math.tanh %153 : vector<8x128xf32>
    %155 = arith.mulf %150, %154 : vector<8x128xf32>
    %156 = vector.extract_strided_slice %0 {offsets = [0, 5], sizes = [8, 1], strides = [1, 1]} : vector<8x8xf32> to vector<8x1xf32>
    %157 = vector.broadcast %156 : vector<8x1xf32> to vector<8x512xf32>
    %158 = vector.broadcast %1 : vector<1x512xf32> to vector<8x512xf32>
    %159 = arith.mulf %157, %158 : vector<8x512xf32>
    %160 = vector.broadcast %2 : vector<1x512xf32> to vector<8x512xf32>
    %161 = arith.addf %159, %160 : vector<8x512xf32>
    %162 = arith.truncf %155 : vector<8x128xf32> to vector<8x128xbf16>
    %cst_23 = arith.constant dense<0.000000e+00> : vector<8x512xf32>
    %163 = tpu.matmul %162, %3, %cst_23 {dimension_numbers = #tpu.dot_dimension_numbers<[1], [0], [0], [1], [0, 0, 1, 1], [], []>} : vector<8x128xbf16>, vector<128x512xbf16>, vector<8x512xf32> -> vector<8x512xf32>
    %164 = arith.addf %161, %163 : vector<8x512xf32>
    %165 = vector.extract_strided_slice %164 {offsets = [0, 0], sizes = [8, 256], strides = [1, 1]} : vector<8x512xf32> to vector<8x256xf32>
    %166 = arith.negf %165 : vector<8x256xf32>
    %167 = math.exp %166 : vector<8x256xf32>
    %cst_24 = arith.constant 1.000000e+00 : f32
    %168 = vector.broadcast %cst_24 : f32 to vector<8x256xf32>
    %169 = arith.addf %168, %167 : vector<8x256xf32>
    %170 = arith.divf %168, %169 : vector<8x256xf32>
    %171 = vector.extract_strided_slice %170 {offsets = [0, 0], sizes = [8, 128], strides = [1, 1]} : vector<8x256xf32> to vector<8x128xf32>
    %172 = vector.extract_strided_slice %170 {offsets = [0, 128], sizes = [8, 128], strides = [1, 1]} : vector<8x256xf32> to vector<8x128xf32>
    %173 = vector.extract_strided_slice %164 {offsets = [0, 256], sizes = [8, 128], strides = [1, 1]} : vector<8x512xf32> to vector<8x128xf32>
    %174 = math.tanh %173 : vector<8x128xf32>
    %175 = vector.extract_strided_slice %164 {offsets = [0, 384], sizes = [8, 128], strides = [1, 1]} : vector<8x512xf32> to vector<8x128xf32>
    %176 = arith.negf %175 : vector<8x128xf32>
    %177 = math.exp %176 : vector<8x128xf32>
    %cst_25 = arith.constant 1.000000e+00 : f32
    %178 = vector.broadcast %cst_25 : f32 to vector<8x128xf32>
    %179 = arith.addf %178, %177 : vector<8x128xf32>
    %180 = arith.divf %178, %179 : vector<8x128xf32>
    %181 = arith.mulf %172, %153 : vector<8x128xf32>
    %182 = arith.mulf %171, %174 : vector<8x128xf32>
    %183 = arith.addf %181, %182 : vector<8x128xf32>
    %184 = math.tanh %183 : vector<8x128xf32>
    %185 = arith.mulf %180, %184 : vector<8x128xf32>
    %186 = vector.extract_strided_slice %0 {offsets = [0, 6], sizes = [8, 1], strides = [1, 1]} : vector<8x8xf32> to vector<8x1xf32>
    %187 = vector.broadcast %186 : vector<8x1xf32> to vector<8x512xf32>
    %188 = vector.broadcast %1 : vector<1x512xf32> to vector<8x512xf32>
    %189 = arith.mulf %187, %188 : vector<8x512xf32>
    %190 = vector.broadcast %2 : vector<1x512xf32> to vector<8x512xf32>
    %191 = arith.addf %189, %190 : vector<8x512xf32>
    %192 = arith.truncf %185 : vector<8x128xf32> to vector<8x128xbf16>
    %cst_26 = arith.constant dense<0.000000e+00> : vector<8x512xf32>
    %193 = tpu.matmul %192, %3, %cst_26 {dimension_numbers = #tpu.dot_dimension_numbers<[1], [0], [0], [1], [0, 0, 1, 1], [], []>} : vector<8x128xbf16>, vector<128x512xbf16>, vector<8x512xf32> -> vector<8x512xf32>
    %194 = arith.addf %191, %193 : vector<8x512xf32>
    %195 = vector.extract_strided_slice %194 {offsets = [0, 0], sizes = [8, 256], strides = [1, 1]} : vector<8x512xf32> to vector<8x256xf32>
    %196 = arith.negf %195 : vector<8x256xf32>
    %197 = math.exp %196 : vector<8x256xf32>
    %cst_27 = arith.constant 1.000000e+00 : f32
    %198 = vector.broadcast %cst_27 : f32 to vector<8x256xf32>
    %199 = arith.addf %198, %197 : vector<8x256xf32>
    %200 = arith.divf %198, %199 : vector<8x256xf32>
    %201 = vector.extract_strided_slice %200 {offsets = [0, 0], sizes = [8, 128], strides = [1, 1]} : vector<8x256xf32> to vector<8x128xf32>
    %202 = vector.extract_strided_slice %200 {offsets = [0, 128], sizes = [8, 128], strides = [1, 1]} : vector<8x256xf32> to vector<8x128xf32>
    %203 = vector.extract_strided_slice %194 {offsets = [0, 256], sizes = [8, 128], strides = [1, 1]} : vector<8x512xf32> to vector<8x128xf32>
    %204 = math.tanh %203 : vector<8x128xf32>
    %205 = vector.extract_strided_slice %194 {offsets = [0, 384], sizes = [8, 128], strides = [1, 1]} : vector<8x512xf32> to vector<8x128xf32>
    %206 = arith.negf %205 : vector<8x128xf32>
    %207 = math.exp %206 : vector<8x128xf32>
    %cst_28 = arith.constant 1.000000e+00 : f32
    %208 = vector.broadcast %cst_28 : f32 to vector<8x128xf32>
    %209 = arith.addf %208, %207 : vector<8x128xf32>
    %210 = arith.divf %208, %209 : vector<8x128xf32>
    %211 = arith.mulf %202, %183 : vector<8x128xf32>
    %212 = arith.mulf %201, %204 : vector<8x128xf32>
    %213 = arith.addf %211, %212 : vector<8x128xf32>
    %214 = math.tanh %213 : vector<8x128xf32>
    %215 = arith.mulf %210, %214 : vector<8x128xf32>
    %216 = vector.extract_strided_slice %0 {offsets = [0, 7], sizes = [8, 1], strides = [1, 1]} : vector<8x8xf32> to vector<8x1xf32>
    %217 = vector.broadcast %216 : vector<8x1xf32> to vector<8x512xf32>
    %218 = vector.broadcast %1 : vector<1x512xf32> to vector<8x512xf32>
    %219 = arith.mulf %217, %218 : vector<8x512xf32>
    %220 = vector.broadcast %2 : vector<1x512xf32> to vector<8x512xf32>
    %221 = arith.addf %219, %220 : vector<8x512xf32>
    %222 = arith.truncf %215 : vector<8x128xf32> to vector<8x128xbf16>
    %cst_29 = arith.constant dense<0.000000e+00> : vector<8x512xf32>
    %223 = tpu.matmul %222, %3, %cst_29 {dimension_numbers = #tpu.dot_dimension_numbers<[1], [0], [0], [1], [0, 0, 1, 1], [], []>} : vector<8x128xbf16>, vector<128x512xbf16>, vector<8x512xf32> -> vector<8x512xf32>
    %224 = arith.addf %221, %223 : vector<8x512xf32>
    %225 = vector.extract_strided_slice %224 {offsets = [0, 0], sizes = [8, 256], strides = [1, 1]} : vector<8x512xf32> to vector<8x256xf32>
    %226 = arith.negf %225 : vector<8x256xf32>
    %227 = math.exp %226 : vector<8x256xf32>
    %cst_30 = arith.constant 1.000000e+00 : f32
    %228 = vector.broadcast %cst_30 : f32 to vector<8x256xf32>
    %229 = arith.addf %228, %227 : vector<8x256xf32>
    %230 = arith.divf %228, %229 : vector<8x256xf32>
    %231 = vector.extract_strided_slice %230 {offsets = [0, 0], sizes = [8, 128], strides = [1, 1]} : vector<8x256xf32> to vector<8x128xf32>
    %232 = vector.extract_strided_slice %230 {offsets = [0, 128], sizes = [8, 128], strides = [1, 1]} : vector<8x256xf32> to vector<8x128xf32>
    %233 = vector.extract_strided_slice %224 {offsets = [0, 256], sizes = [8, 128], strides = [1, 1]} : vector<8x512xf32> to vector<8x128xf32>
    %234 = math.tanh %233 : vector<8x128xf32>
    %235 = vector.extract_strided_slice %224 {offsets = [0, 384], sizes = [8, 128], strides = [1, 1]} : vector<8x512xf32> to vector<8x128xf32>
    %236 = arith.negf %235 : vector<8x128xf32>
    %237 = math.exp %236 : vector<8x128xf32>
    %cst_31 = arith.constant 1.000000e+00 : f32
    %238 = vector.broadcast %cst_31 : f32 to vector<8x128xf32>
    %239 = arith.addf %238, %237 : vector<8x128xf32>
    %240 = arith.divf %238, %239 : vector<8x128xf32>
    %241 = arith.mulf %232, %213 : vector<8x128xf32>
    %242 = arith.mulf %231, %234 : vector<8x128xf32>
    %243 = arith.addf %241, %242 : vector<8x128xf32>
    %244 = math.tanh %243 : vector<8x128xf32>
    %245 = arith.mulf %240, %244 : vector<8x128xf32>
    %246 = arith.truncf %245 : vector<8x128xf32> to vector<8x128xbf16>
    %c0_32 = arith.constant 0 : index
    %c0_33 = arith.constant 0 : index
    %247 = vector.load %arg4[%c0_32, %c0_33] : memref<128x128xbf16, #tpu.memory_space<vmem>>, vector<128x128xbf16>
    %cst_34 = arith.constant dense<0.000000e+00> : vector<8x128xf32>
    %248 = tpu.matmul %246, %247, %cst_34 {dimension_numbers = #tpu.dot_dimension_numbers<[1], [0], [0], [1], [0, 0, 1, 1], [], []>} : vector<8x128xbf16>, vector<128x128xbf16>, vector<8x128xf32> -> vector<8x128xf32>
    %c0_35 = arith.constant 0 : index
    %c0_36 = arith.constant 0 : index
    %249 = vector.load %arg5[%c0_35, %c0_36] : memref<1x128xf32, #tpu.memory_space<vmem>>, vector<1x128xf32>
    %250 = vector.broadcast %249 : vector<1x128xf32> to vector<8x128xf32>
    %251 = arith.addf %248, %250 : vector<8x128xf32>
    %c0_37 = arith.constant 0 : index
    %c0_38 = arith.constant 0 : index
    %252 = vector.load %arg6[%c0_37, %c0_38] : memref<8x128xf32, #tpu.memory_space<vmem>>, vector<8x128xf32>
    tpu.vector_store %arg6[%c0_37, %c0_38], %251 {strides = array<i32>} : memref<8x128xf32, #tpu.memory_space<vmem>>, vector<8x128xf32>,
    return
  }
}

</mosaic_0001>

<llo_original>
// kernel: tpu_custom_call.1
$region0: #{tpu_custom_call.1}
  #allocation0 [shape = 'u32[]', space=smem, size = 0x4, offset = 0x4, fixed_abs, tag = 'smem constant byte address 0x4 - core index']
  #allocation1 [shape = 'u32[72,128]{1,0:T(1,128)}', space=vmem, size = 0x9000, scoped, tag = 'internal scratch']
  %s0 = inlined_call_operand.hbm [shape: f32[8,8], index: 0, kind: input, shape index: {}]
  %s1 = inlined_call_operand.hbm [shape: f32[1,512], index: 1, kind: input, shape index: {}]
  %s2 = inlined_call_operand.hbm [shape: bf16[128,512], index: 2, kind: input, shape index: {}]
  %s3 = inlined_call_operand.hbm [shape: f32[1,512], index: 3, kind: input, shape index: {}]
  %s4 = inlined_call_operand.hbm [shape: bf16[128,128], index: 4, kind: input, shape index: {}]
  %s5 = inlined_call_operand.vmem [shape: f32[1,128], index: 5, kind: input, shape index: {}]
  %s6 = inlined_call_operand.hbm [shape: f32[8,128], index: 6, kind: output, shape index: {}]
  %s7 = sld [smem:[#allocation0]]
  $region54: #{tpu_custom_call.1} parent=0
    _
  %s9 = ssub.s32 1, %s7
  %s10 = scalar_select 0, %s9, %s7
  $region1: #{tpu_custom_call.1} parent=0
    #allocation2 [shape = 'u8[4096]{0}', space=vmem, size = 0x1000, scoped, tag = 'input window, operand 0, single buffered']
    #allocation3 [shape = 's32[1]{0}', space=sflag, size = 0x4, scoped, tag = 'scoped memory for tpu_custom_call.1']
    #allocation4 [shape = 's32[1]{0}', space=sflag, size = 0x4, scoped, tag = 'scoped memory for tpu_custom_call.1']
    #allocation5 [shape = 'u8[2048]{0}', space=vmem, size = 0x800, scoped, tag = 'input window, operand 1, single buffered']
    #allocation6 [shape = 's32[1]{0}', space=sflag, size = 0x4, scoped, tag = 'scoped memory for tpu_custom_call.1']
    #allocation7 [shape = 'u8[131072]{0}', space=vmem, size = 0x20000, scoped, tag = 'input window, operand 2, single buffered']
    #allocation8 [shape = 'u8[2048]{0}', space=vmem, size = 0x800, scoped, tag = 'input window, operand 3, single buffered']
    #allocation9 [shape = 's32[1]{0}', space=sflag, size = 0x4, scoped, tag = 'scoped memory for tpu_custom_call.1']
    #allocation10 [shape = 'u8[32768]{0}', space=vmem, size = 0x8000, scoped, tag = 'input window, operand 4, single buffered']
    #allocation11 [shape = 'u8[4096]{0}', space=vmem, size = 0x1000, scoped, tag = 'output window, operand 0, single buffered']
    %11 = vsyncpa [#allocation3], 0
    %12 = vsyncpa [#allocation6], 0
    %13 = vsyncpa [#allocation9], 0
    %14 = vsyncpa [#allocation4], 0
    // Predicated region
    $region2: #{tpu_custom_call.1} parent=1 // pred_check
      _
    $region3: #{tpu_custom_call.1} parent=1 // pred_check_branch
      %16 = sbr.rel (0) target = $region5
    $region4: #{tpu_custom_call.1} parent=1 // pred_region
      %18 = vsyncadd [#allocation3], 0
      %s20 = sshll.u32 %s0, 4
      %s21 = int_to_ptr.hbm [resolvable:$true] %s20
      %s22 = sshll.u32 [#allocation2], 4
      %s23 = int_to_ptr.vmem [resolvable:$true] %s22
      %25 = dma.hbm_to_vmem [thread:$0]  %s21, 128, %s23, [#allocation3]
    $region5: #{tpu_custom_call.1} parent=1 // pred_fallthru
      _
    // Predicated region
    $region6: #{tpu_custom_call.1} parent=1 // pred_check
      _
    $region7: #{tpu_custom_call.1} parent=1 // pred_check_branch
      %27 = sbr.rel (0) target = $region9
    $region8: #{tpu_custom_call.1} parent=1 // pred_region
      %29 = vsyncadd [#allocation6], 0
      %s31 = sshll.u32 %s1, 4
      %s32 = int_to_ptr.hbm [resolvable:$true] %s31
      %s33 = sshll.u32 [#allocation5], 4
      %s34 = int_to_ptr.vmem [resolvable:$true] %s33
      %36 = dma.hbm_to_vmem [thread:$0]  %s32, 64, %s34, [#allocation6]
    $region9: #{tpu_custom_call.1} parent=1 // pred_fallthru
      _
    // Predicated region
    $region10: #{tpu_custom_call.1} parent=1 // pred_check
      _
    $region11: #{tpu_custom_call.1} parent=1 // pred_check_branch
      %38 = sbr.rel (0) target = $region13
    $region12: #{tpu_custom_call.1} parent=1 // pred_region
      %40 = vsyncadd [#allocation6], 0
      %s41 = sshll.u32 %s2, 4
      %s42 = int_to_ptr.hbm [resolvable:$true] %s41
      %s43 = sshll.u32 [#allocation7], 4
      %s44 = int_to_ptr.vmem [resolvable:$true] %s43
      %49 = dma.hbm_to_vmem [thread:$0]  %s42, 4096, %s44, [#allocation6], 256, 256, 16
    $region13: #{tpu_custom_call.1} parent=1 // pred_fallthru
      _
    // Predicated region
    $region14: #{tpu_custom_call.1} parent=1 // pred_check
      _
    $region15: #{tpu_custom_call.1} parent=1 // pred_check_branch
      %51 = sbr.rel (0) target = $region17
    $region16: #{tpu_custom_call.1} parent=1 // pred_region
      %53 = vsyncadd [#allocation9], 0
      %s55 = sshll.u32 %s3, 4
      %s56 = int_to_ptr.hbm [resolvable:$true] %s55
      %s57 = sshll.u32 [#allocation8], 4
      %s58 = int_to_ptr.vmem [resolvable:$true] %s57
      %60 = dma.hbm_to_vmem [thread:$0]  %s56, 64, %s58, [#allocation9]
    $region17: #{tpu_custom_call.1} parent=1 // pred_fallthru
      _
    // Predicated region
    $region18: #{tpu_custom_call.1} parent=1 // pred_check
      _
    $region19: #{tpu_custom_call.1} parent=1 // pred_check_branch
      %62 = sbr.rel (0) target = $region21
    $region20: #{tpu_custom_call.1} parent=1 // pred_region
      %64 = vsyncadd [#allocation9], 0
      %s65 = sshll.u32 %s4, 4
      %s66 = int_to_ptr.hbm [resolvable:$true] %s65
      %s67 = sshll.u32 [#allocation10], 4
      %s68 = int_to_ptr.vmem [resolvable:$true] %s67
      %73 = dma.hbm_to_vmem [thread:$0]  %s66, 1024, %s68, [#allocation9], 64, 64, 4
    $region21: #{tpu_custom_call.1} parent=1 // pred_fallthru
      _
    // Predicated region
    $region22: #{tpu_custom_call.1} parent=1 // pred_check
      _
    $region23: #{tpu_custom_call.1} parent=1 // pred_check_branch
      %75 = sbr.rel (0) target = $region25
    $region24: #{tpu_custom_call.1} parent=1 // pred_region
      _
    $region25: #{tpu_custom_call.1} parent=1 // pred_fallthru
      _
    // Predicated region
    $region26: #{tpu_custom_call.1} parent=1 // pred_check
      _
    $region27: #{tpu_custom_call.1} parent=1 // pred_check_branch
      %77 = sbr.rel (0) target = $region29
    $region28: #{tpu_custom_call.1} parent=1 // pred_region
      %79 = dma.done [#allocation3], 128
    $region29: #{tpu_custom_call.1} parent=1 // pred_fallthru
      _
    // Predicated region
    $region30: #{tpu_custom_call.1} parent=1 // pred_check
      _
    $region31: #{tpu_custom_call.1} parent=1 // pred_check_branch
      %81 = sbr.rel (0) target = $region33
    $region32: #{tpu_custom_call.1} parent=1 // pred_region
      %83 = dma.done [#allocation6], 64
    $region33: #{tpu_custom_call.1} parent=1 // pred_fallthru
      _
    // Predicated region
    $region34: #{tpu_custom_call.1} parent=1 // pred_check
      _
    $region35: #{tpu_custom_call.1} parent=1 // pred_check_branch
      %85 = sbr.rel (0) target = $region37
    $region36: #{tpu_custom_call.1} parent=1 // pred_region
      %87 = dma.done [#allocation6], 4096
    $region37: #{tpu_custom_call.1} parent=1 // pred_fallthru
      _
    // Predicated region
    $region38: #{tpu_custom_call.1} parent=1 // pred_check
      _
    $region39: #{tpu_custom_call.1} parent=1 // pred_check_branch
      %89 = sbr.rel (0) target = $region41
    $region40: #{tpu_custom_call.1} parent=1 // pred_region
      %91 = dma.done [#allocation9], 64
    $region41: #{tpu_custom_call.1} parent=1 // pred_fallthru
      _
    // Predicated region
    $region42: #{tpu_custom_call.1} parent=1 // pred_check
      _
    $region43: #{tpu_custom_call.1} parent=1 // pred_check_branch
      %93 = sbr.rel (0) target = $region45
    $region44: #{tpu_custom_call.1} parent=1 // pred_region
      %95 = dma.done [#allocation9], 1024
    $region45: #{tpu_custom_call.1} parent=1 // pred_fallthru
      _
    %v97 = vld [vmem:[#allocation2] sm:$0xff]
    %v98 = vld [vmem:[#allocation5] sm:$0xf]
    %v99 = vld [vmem:[#allocation8] sm:$0xf]
    %v100 = vld [vmem:[#allocation7] sm:$0xff]
    %v101 = vld [vmem:[#allocation7 + $0x8] sm:$0xff]
    %v102 = vld [vmem:[#allocation7 + $0x10] sm:$0xff]
    %v103 = vld [vmem:[#allocation7 + $0x18] sm:$0xff]
    %v104 = vld [vmem:[#allocation7 + $0x20] sm:$0xff]
    %v105 = vld [vmem:[#allocation7 + $0x28] sm:$0xff]
    %v106 = vld [vmem:[#allocation7 + $0x30] sm:$0xff]
    %v107 = vld [vmem:[#allocation7 + $0x38] sm:$0xff]
    %v108 = vld [vmem:[#allocation7 + $0x40] sm:$0xff]
    %v109 = vld [vmem:[#allocation7 + $0x48] sm:$0xff]
    %v110 = vld [vmem:[#allocation7 + $0x50] sm:$0xff]
    %v111 = vld [vmem:[#allocation7 + $0x58] sm:$0xff]
    %v112 = vld [vmem:[#allocation7 + $0x60] sm:$0xff]
    %v113 = vld [vmem:[#allocation7 + $0x68] sm:$0xff]
    %v114 = vld [vmem:[#allocation7 + $0x70] sm:$0xff]
    %v115 = vld [vmem:[#allocation7 + $0x78] sm:$0xff]
    %v116 = vld [vmem:[#allocation7 + $0x80] sm:$0xff]
    %v117 = vld [vmem:[#allocation7 + $0x88] sm:$0xff]
    %v118 = vld [vmem:[#allocation7 + $0x90] sm:$0xff]
    %v119 = vld [vmem:[#allocation7 + $0x98] sm:$0xff]
    %v120 = vld [vmem:[#allocation7 + $0xa0] sm:$0xff]
    %v121 = vld [vmem:[#allocation7 + $0xa8] sm:$0xff]
    %v122 = vld [vmem:[#allocation7 + $0xb0] sm:$0xff]
    %v123 = vld [vmem:[#allocation7 + $0xb8] sm:$0xff]
    %v124 = vld [vmem:[#allocation7 + $0xc0] sm:$0xff]
    %v125 = vld [vmem:[#allocation7 + $0xc8] sm:$0xff]
    %v126 = vld [vmem:[#allocation7 + $0xd0] sm:$0xff]
    %v127 = vld [vmem:[#allocation7 + $0xd8] sm:$0xff]
    %v128 = vld [vmem:[#allocation7 + $0xe0] sm:$0xff]
    %v129 = vld [vmem:[#allocation7 + $0xe8] sm:$0xff]
    %v130 = vld [vmem:[#allocation7 + $0xf0] sm:$0xff]
    %v131 = vld [vmem:[#allocation7 + $0xf8] sm:$0xff]
    %133 = vset.pattern.permute.xlu0 0
    %134 = vperm.xlu0 %133, %v97
    %v135 = vpop.permute.xlu0 %134
    %v138 = vperm.slane %v98, 0
    %v139 = vperm.slane %v98, 1
    %v140 = vperm.slane %v98, 2
    %v141 = vperm.slane %v98, 3
    %v146 = vmul.f32 %v135, %v138
    %v147 = vmul.f32 %v135, %v139
    %v148 = vmul.f32 %v135, %v140
    %v149 = vmul.f32 %v135, %v141
    %v151 = vperm.slane %v99, 0
    %v152 = vperm.slane %v99, 1
    %v153 = vperm.slane %v99, 2
    %v154 = vperm.slane %v99, 3
    %v159 = vadd.f32 %v146, %v151
    %v160 = vadd.f32 %v147, %v152
    %v161 = vadd.f32 %v148, %v153
    %v162 = vadd.f32 %v149, %v154
    %v195 = vunpack.c.l.b16 %v100
    %v196 = vunpack.c.h.b16 %v100
    %v197 = vunpack.c.l.b16 %v101
    %v198 = vunpack.c.h.b16 %v101
    %v199 = vunpack.c.l.b16 %v102
    %v200 = vunpack.c.h.b16 %v102
    %v201 = vunpack.c.l.b16 %v103
    %v202 = vunpack.c.h.b16 %v103
    %v203 = vunpack.c.l.b16 %v104
    %v204 = vunpack.c.h.b16 %v104
    %v205 = vunpack.c.l.b16 %v105
    %v206 = vunpack.c.h.b16 %v105
    %v207 = vunpack.c.l.b16 %v106
    %v208 = vunpack.c.h.b16 %v106
    %v209 = vunpack.c.l.b16 %v107
    %v210 = vunpack.c.h.b16 %v107
    %v211 = vunpack.c.l.b16 %v108
    %v212 = vunpack.c.h.b16 %v108
    %v213 = vunpack.c.l.b16 %v109
    %v214 = vunpack.c.h.b16 %v109
    %v215 = vunpack.c.l.b16 %v110
    %v216 = vunpack.c.h.b16 %v110
    %v217 = vunpack.c.l.b16 %v111
    %v218 = vunpack.c.h.b16 %v111
    %v219 = vunpack.c.l.b16 %v112
    %v220 = vunpack.c.h.b16 %v112
    %v221 = vunpack.c.l.b16 %v113
    %v222 = vunpack.c.h.b16 %v113
    %v223 = vunpack.c.l.b16 %v114
    %v224 = vunpack.c.h.b16 %v114
    %v225 = vunpack.c.l.b16 %v115
    %v226 = vunpack.c.h.b16 %v115
    %v227 = vunpack.c.l.b16 %v116
    %v228 = vunpack.c.h.b16 %v116
    %v229 = vunpack.c.l.b16 %v117
    %v230 = vunpack.c.h.b16 %v117
    %v231 = vunpack.c.l.b16 %v118
    %v232 = vunpack.c.h.b16 %v118
    %v233 = vunpack.c.l.b16 %v119
    %v234 = vunpack.c.h.b16 %v119
    %v235 = vunpack.c.l.b16 %v120
    %v236 = vunpack.c.h.b16 %v120
    %v237 = vunpack.c.l.b16 %v121
    %v238 = vunpack.c.h.b16 %v121
    %v239 = vunpack.c.l.b16 %v122
    %v240 = vunpack.c.h.b16 %v122
    %v241 = vunpack.c.l.b16 %v123
    %v242 = vunpack.c.h.b16 %v123
    %v243 = vunpack.c.l.b16 %v124
    %v244 = vunpack.c.h.b16 %v124
    %v245 = vunpack.c.l.b16 %v125
    %v246 = vunpack.c.h.b16 %v125
    %v247 = vunpack.c.l.b16 %v126
    %v248 = vunpack.c.h.b16 %v126
    %v249 = vunpack.c.l.b16 %v127
    %v250 = vunpack.c.h.b16 %v127
    %v251 = vunpack.c.l.b16 %v128
    %v252 = vunpack.c.h.b16 %v128
    %v253 = vunpack.c.l.b16 %v129
    %v254 = vunpack.c.h.b16 %v129
    %v255 = vunpack.c.l.b16 %v130
    %v256 = vunpack.c.h.b16 %v130
    %v257 = vunpack.c.l.b16 %v131
    %v258 = vunpack.c.h.b16 %v131
    %v259 = vpack.c.b16 %v199, %v195
    %v260 = vpack.c.b16 %v200, %v196
    %v261 = vpack.c.b16 %v201, %v197
    %v262 = vpack.c.b16 %v202, %v198
    %v263 = vpack.c.b16 %v207, %v203
    %v264 = vpack.c.b16 %v208, %v204
    %v265 = vpack.c.b16 %v209, %v205
    %v266 = vpack.c.b16 %v210, %v206
    %v267 = vpack.c.b16 %v215, %v211
    %v268 = vpack.c.b16 %v216, %v212
    %v269 = vpack.c.b16 %v217, %v213
    %v270 = vpack.c.b16 %v218, %v214
    %v271 = vpack.c.b16 %v223, %v219
    %v272 = vpack.c.b16 %v224, %v220
    %v273 = vpack.c.b16 %v225, %v221
    %v274 = vpack.c.b16 %v226, %v222
    %v275 = vpack.c.b16 %v231, %v227
    %v276 = vpack.c.b16 %v232, %v228
    %v277 = vpack.c.b16 %v233, %v229
    %v278 = vpack.c.b16 %v234, %v230
    %v279 = vpack.c.b16 %v239, %v235
    %v280 = vpack.c.b16 %v240, %v236
    %v281 = vpack.c.b16 %v241, %v237
    %v282 = vpack.c.b16 %v242, %v238
    %v283 = vpack.c.b16 %v247, %v243
    %v284 = vpack.c.b16 %v248, %v244
    %v285 = vpack.c.b16 %v249, %v245
    %v286 = vpack.c.b16 %v250, %v246
    %v287 = vpack.c.b16 %v255, %v251
    %v288 = vpack.c.b16 %v256, %v252
    %v289 = vpack.c.b16 %v257, %v253
    %v290 = vpack.c.b16 %v258, %v254
    %323 = vmatpush.bf16.msra.mxu0 %v287
    %324 = vmatpush.bf16.msra.mxu0 %v283
    %325 = vmatpush.bf16.msra.mxu0 %v279
    %326 = vmatpush.bf16.msra.mxu0 %v275
    %327 = vmatpush.bf16.msra.mxu0 %v271
    %328 = vmatpush.bf16.msra.mxu0 %v267
    %329 = vmatpush.bf16.msra.mxu0 %v263
    %330 = vmatpush.bf16.msra.mxu0 %v259
    %331 = vmatmul.bf16.gmra.mxu0 0
    %v332 = vpop.f32.mrf.mxu0
    %v333 = vadd.f32 0.0, %v332
    %v334 = vpop.f32.mrf.mxu0
    %335 = vdwg.mxu0
    %336 = vmatpush.bf16.msra.mxu0 %v288
    %337 = vmatpush.bf16.msra.mxu0 %v284
    %338 = vmatpush.bf16.msra.mxu0 %v280
    %339 = vmatpush.bf16.msra.mxu0 %v276
    %340 = vmatpush.bf16.msra.mxu0 %v272
    %341 = vmatpush.bf16.msra.mxu0 %v268
    %342 = vmatpush.bf16.msra.mxu0 %v264
    %343 = vmatpush.bf16.msra.mxu0 %v260
    %344 = vmatmul.bf16.gmra.mxu0 0
    %v345 = vpop.f32.mrf.mxu0
    %v346 = vadd.f32 0.0, %v345
    %v347 = vpop.f32.mrf.mxu0
    %348 = vdwg.mxu0
    %349 = vmatpush.bf16.msra.mxu0 %v289
    %350 = vmatpush.bf16.msra.mxu0 %v285
    %351 = vmatpush.bf16.msra.mxu0 %v281
    %352 = vmatpush.bf16.msra.mxu0 %v277
    %353 = vmatpush.bf16.msra.mxu0 %v273
    %354 = vmatpush.bf16.msra.mxu0 %v269
    %355 = vmatpush.bf16.msra.mxu0 %v265
    %356 = vmatpush.bf16.msra.mxu0 %v261
    %357 = vmatmul.bf16.gmra.mxu0 0
    %v358 = vpop.f32.mrf.mxu0
    %v359 = vadd.f32 0.0, %v358
    %v360 = vpop.f32.mrf.mxu0
    %361 = vdwg.mxu0
    %362 = vmatpush.bf16.msra.mxu0 %v290
    %363 = vmatpush.bf16.msra.mxu0 %v286
    %364 = vmatpush.bf16.msra.mxu0 %v282
    %365 = vmatpush.bf16.msra.mxu0 %v278
    %366 = vmatpush.bf16.msra.mxu0 %v274
    %367 = vmatpush.bf16.msra.mxu0 %v270
    %368 = vmatpush.bf16.msra.mxu0 %v266
    %369 = vmatpush.bf16.msra.mxu0 %v262
    %370 = vmatmul.bf16.gmra.mxu0 0
    %v371 = vpop.f32.mrf.mxu0
    %v372 = vadd.f32 0.0, %v371
    %v373 = vpop.f32.mrf.mxu0
    %374 = vdwg.mxu0
    %v375 = vadd.f32 %v159, %v333
    %v376 = vadd.f32 %v160, %v346
    %v377 = vadd.f32 %v161, %v359
    %v378 = vadd.f32 %v162, %v372
    %v379 = vxor.u32 %v375, 2147483648
    %v380 = vxor.u32 %v376, 2147483648
    %v381 = vmul.f32 %v379, 1.442695
    %v382 = vpow.pop %v381
    %v383 = vmul.f32 %v380, 1.442695
    %v384 = vpow.pop %v383
    %v385 = vadd.f32 %v382, 1.0
    %v386 = vadd.f32 %v384, 1.0
    %v387 = vrcp.pop %v385
    %v388 = vmul.f32 %v385, %v387
    %v389 = vsub.f32 1.0, %v388
    %v390 = vmul.f32 %v387, %v389
    %v391 = vadd.f32 %v387, %v390
    %vm392 = vweird.f32 %v385
    %vm393 = vweird.f32 %v387
    %vm394 = vmor %vm392, %vm393
    %v395 = vsel %vm394, %v387, %v391
    %v396 = vand.u32 2147483647, %v385
    %vm397 = vcmp.eq.f32.partialorder %v396, 8.507059e+37
    %v398 = vand.u32 %v385, 2147483648
    %v399 = vor.u32 1.1754944e-38, %v398
    %v400 = vsel %vm397, %v399, %v395
    %v401 = vmul.f32 1.0, %v400
    %v402 = vrcp.pop %v386
    %v403 = vmul.f32 %v386, %v402
    %v404 = vsub.f32 1.0, %v403
    %v405 = vmul.f32 %v402, %v404
    %v406 = vadd.f32 %v402, %v405
    %vm407 = vweird.f32 %v386
    %vm408 = vweird.f32 %v402
    %vm409 = vmor %vm407, %vm408
    %v410 = vsel %vm409, %v402, %v406
    %v411 = vand.u32 2147483647, %v386
    %vm412 = vcmp.eq.f32.partialorder %v411, 8.507059e+37
    %v413 = vand.u32 %v386, 2147483648
    %v414 = vor.u32 1.1754944e-38, %v413
    %v415 = vsel %vm412, %v414, %v410
    %v416 = vmul.f32 1.0, %v415
    %v417 = vtanh.pop %v377
    %v418 = vxor.u32 %v378, 2147483648
    %v419 = vmul.f32 %v418, 1.442695
    %v420 = vpow.pop %v419
    %v421 = vadd.f32 %v420, 1.0
    %v422 = vrcp.pop %v421
    %v423 = vmul.f32 %v421, %v422
    %v424 = vsub.f32 1.0, %v423
    %v425 = vmul.f32 %v422, %v424
    %v426 = vadd.f32 %v422, %v425
    %vm427 = vweird.f32 %v421
    %vm428 = vweird.f32 %v422
    %vm429 = vmor %vm427, %vm428
    %v430 = vsel %vm429, %v422, %v426
    %v431 = vand.u32 2147483647, %v421
    %vm432 = vcmp.eq.f32.partialorder %v431, 8.507059e+37
    %v433 = vand.u32 %v421, 2147483648
    %v434 = vor.u32 1.1754944e-38, %v433
    %v435 = vsel %vm432, %v434, %v430
    %v436 = vmul.f32 1.0, %v435
    %v437 = vmul.f32 %v416, 0.0
    %v438 = vmul.f32 %v401, %v417
    %v439 = vadd.f32 %v437, %v438
    %v440 = vtanh.pop %v439
    %v441 = vmul.f32 %v436, %v440
    %442 = vset.pattern.permute.xlu0 1
    %443 = vperm.xlu0 %442, %v97
    %v444 = vpop.permute.xlu0 %443
    %v446 = vmul.f32 %v444, %v138
    %v447 = vmul.f32 %v444, %v139
    %v448 = vmul.f32 %v444, %v140
    %v449 = vmul.f32 %v444, %v141
    %v450 = vadd.f32 %v446, %v151
    %v451 = vadd.f32 %v447, %v152
    %v452 = vadd.f32 %v448, %v153
    %v453 = vadd.f32 %v449, %v154
    %v454 = vpack.c.bf16 %v441, %v441
    %455 = vmatpush.bf16.msra.mxu0 %v287
    %456 = vmatpush.bf16.msra.mxu0 %v283
    %457 = vmatpush.bf16.msra.mxu0 %v279
    %458 = vmatpush.bf16.msra.mxu0 %v275
    %459 = vmatpush.bf16.msra.mxu0 %v271
    %460 = vmatpush.bf16.msra.mxu0 %v267
    %461 = vmatpush.bf16.msra.mxu0 %v263
    %462 = vmatpush.bf16.msra.mxu0 %v259
    %463 = vmatmul.bf16.gmra.mxu0 %v454
    %v464 = vpop.f32.mrf.mxu0
    %v465 = vadd.f32 0.0, %v464
    %v466 = vpop.f32.mrf.mxu0
    %467 = vdwg.mxu0
    %468 = vmatpush.bf16.msra.mxu0 %v288
    %469 = vmatpush.bf16.msra.mxu0 %v284
    %470 = vmatpush.bf16.msra.mxu0 %v280
    %471 = vmatpush.bf16.msra.mxu0 %v276
    %472 = vmatpush.bf16.msra.mxu0 %v272
    %473 = vmatpush.bf16.msra.mxu0 %v268
    %474 = vmatpush.bf16.msra.mxu0 %v264
    %475 = vmatpush.bf16.msra.mxu0 %v260
    %476 = vmatmul.bf16.gmra.mxu0 %v454
    %v477 = vpop.f32.mrf.mxu0
    %v478 = vadd.f32 0.0, %v477
    %v479 = vpop.f32.mrf.mxu0
    %480 = vdwg.mxu0
    %481 = vmatpush.bf16.msra.mxu0 %v289
    %482 = vmatpush.bf16.msra.mxu0 %v285
    %483 = vmatpush.bf16.msra.mxu0 %v281
    %484 = vmatpush.bf16.msra.mxu0 %v277
    %485 = vmatpush.bf16.msra.mxu0 %v273
    %486 = vmatpush.bf16.msra.mxu0 %v269
    %487 = vmatpush.bf16.msra.mxu0 %v265
    %488 = vmatpush.bf16.msra.mxu0 %v261
    %489 = vmatmul.bf16.gmra.mxu0 %v454
    %v490 = vpop.f32.mrf.mxu0
    %v491 = vadd.f32 0.0, %v490
    %v492 = vpop.f32.mrf.mxu0
    %493 = vdwg.mxu0
    %494 = vmatpush.bf16.msra.mxu0 %v290
    %495 = vmatpush.bf16.msra.mxu0 %v286
    %496 = vmatpush.bf16.msra.mxu0 %v282
    %497 = vmatpush.bf16.msra.mxu0 %v278
    %498 = vmatpush.bf16.msra.mxu0 %v274
    %499 = vmatpush.bf16.msra.mxu0 %v270
    %500 = vmatpush.bf16.msra.mxu0 %v266
    %501 = vmatpush.bf16.msra.mxu0 %v262
    %502 = vmatmul.bf16.gmra.mxu0 %v454
    %v503 = vpop.f32.mrf.mxu0
    %v504 = vadd.f32 0.0, %v503
    %v505 = vpop.f32.mrf.mxu0
    %506 = vdwg.mxu0
    %v507 = vadd.f32 %v450, %v465
    %v508 = vadd.f32 %v451, %v478
    %v509 = vadd.f32 %v452, %v491
    %v510 = vadd.f32 %v453, %v504
    %v511 = vxor.u32 %v507, 2147483648
    %v512 = vxor.u32 %v508, 2147483648
    %v513 = vmul.f32 %v511, 1.442695
    %v514 = vpow.pop %v513
    %v515 = vmul.f32 %v512, 1.442695
    %v516 = vpow.pop %v515
    %v517 = vadd.f32 %v514, 1.0
    %v518 = vadd.f32 %v516, 1.0
    %v519 = vrcp.pop %v517
    %v520 = vmul.f32 %v517, %v519
    %v521 = vsub.f32 1.0, %v520
    %v522 = vmul.f32 %v519, %v521
    %v523 = vadd.f32 %v519, %v522
    %vm524 = vweird.f32 %v517
    %vm525 = vweird.f32 %v519
    %vm526 = vmor %vm524, %vm525
    %v527 = vsel %vm526, %v519, %v523
    %v528 = vand.u32 2147483647, %v517
    %vm529 = vcmp.eq.f32.partialorder %v528, 8.507059e+37
    %v530 = vand.u32 %v517, 2147483648
    %v531 = vor.u32 1.1754944e-38, %v530
    %v532 = vsel %vm529, %v531, %v527
    %v533 = vmul.f32 1.0, %v532
    %v534 = vrcp.pop %v518
    %v535 = vmul.f32 %v518, %v534
    %v536 = vsub.f32 1.0, %v535
    %v537 = vmul.f32 %v534, %v536
    %v538 = vadd.f32 %v534, %v537
    %vm539 = vweird.f32 %v518
    %vm540 = vweird.f32 %v534
    %vm541 = vmor %vm539, %vm540
    %v542 = vsel %vm541, %v534, %v538
    %v543 = vand.u32 2147483647, %v518
    %vm544 = vcmp.eq.f32.partialorder %v543, 8.507059e+37
    %v545 = vand.u32 %v518, 2147483648
    %v546 = vor.u32 1.1754944e-38, %v545
    %v547 = vsel %vm544, %v546, %v542
    %v548 = vmul.f32 1.0, %v547
    %v549 = vtanh.pop %v509
    %v550 = vxor.u32 %v510, 2147483648
    %v551 = vmul.f32 %v550, 1.442695
    %v552 = vpow.pop %v551
    %v553 = vadd.f32 %v552, 1.0
    %v554 = vrcp.pop %v553
    %v555 = vmul.f32 %v553, %v554
    %v556 = vsub.f32 1.0, %v555
    %v557 = vmul.f32 %v554, %v556
    %v558 = vadd.f32 %v554, %v557
    %vm559 = vweird.f32 %v553
    %vm560 = vweird.f32 %v554
    %vm561 = vmor %vm559, %vm560
    %v562 = vsel %vm561, %v554, %v558
    %v563 = vand.u32 2147483647, %v553
    %vm564 = vcmp.eq.f32.partialorder %v563, 8.507059e+37
    %v565 = vand.u32 %v553, 2147483648
    %v566 = vor.u32 1.1754944e-38, %v565
    %v567 = vsel %vm564, %v566, %v562
    %v568 = vmul.f32 1.0, %v567
    %v569 = vmul.f32 %v548, %v439
    %v570 = vmul.f32 %v533, %v549
    %v571 = vadd.f32 %v569, %v570
    %v572 = vtanh.pop %v571
    %v573 = vmul.f32 %v568, %v572
    %574 = vset.pattern.permute.xlu0 2
    %575 = vperm.xlu0 %574, %v97
    %v576 = vpop.permute.xlu0 %575
    %v578 = vmul.f32 %v576, %v138
    %v579 = vmul.f32 %v576, %v139
    %v580 = vmul.f32 %v576, %v140
    %v581 = vmul.f32 %v576, %v141
    %v582 = vadd.f32 %v578, %v151
    %v583 = vadd.f32 %v579, %v152
    %v584 = vadd.f32 %v580, %v153
    %v585 = vadd.f32 %v581, %v154
    %v586 = vpack.c.bf16 %v573, %v573
    %587 = vmatpush.bf16.msra.mxu0 %v287
    %588 = vmatpush.bf16.msra.mxu0 %v283
    %589 = vmatpush.bf16.msra.mxu0 %v279
    %590 = vmatpush.bf16.msra.mxu0 %v275
    %591 = vmatpush.bf16.msra.mxu0 %v271
    %592 = vmatpush.bf16.msra.mxu0 %v267
    %593 = vmatpush.bf16.msra.mxu0 %v263
    %594 = vmatpush.bf16.msra.mxu0 %v259
    %595 = vmatmul.bf16.gmra.mxu0 %v586
    %v596 = vpop.f32.mrf.mxu0
    %v597 = vadd.f32 0.0, %v596
    %v598 = vpop.f32.mrf.mxu0
    %599 = vdwg.mxu0
    %600 = vmatpush.bf16.msra.mxu0 %v288
    %601 = vmatpush.bf16.msra.mxu0 %v284
    %602 = vmatpush.bf16.msra.mxu0 %v280
    %603 = vmatpush.bf16.msra.mxu0 %v276
    %604 = vmatpush.bf16.msra.mxu0 %v272
    %605 = vmatpush.bf16.msra.mxu0 %v268
    %606 = vmatpush.bf16.msra.mxu0 %v264
    %607 = vmatpush.bf16.msra.mxu0 %v260
    %608 = vmatmul.bf16.gmra.mxu0 %v586
    %v609 = vpop.f32.mrf.mxu0
    %v610 = vadd.f32 0.0, %v609
    %v611 = vpop.f32.mrf.mxu0
    %612 = vdwg.mxu0
    %613 = vmatpush.bf16.msra.mxu0 %v289
    %614 = vmatpush.bf16.msra.mxu0 %v285
    %615 = vmatpush.bf16.msra.mxu0 %v281
    %616 = vmatpush.bf16.msra.mxu0 %v277
    %617 = vmatpush.bf16.msra.mxu0 %v273
    %618 = vmatpush.bf16.msra.mxu0 %v269
    %619 = vmatpush.bf16.msra.mxu0 %v265
    %620 = vmatpush.bf16.msra.mxu0 %v261
    %621 = vmatmul.bf16.gmra.mxu0 %v586
    %v622 = vpop.f32.mrf.mxu0
    %v623 = vadd.f32 0.0, %v622
    %v624 = vpop.f32.mrf.mxu0
    %625 = vdwg.mxu0
    %626 = vmatpush.bf16.msra.mxu0 %v290
    %627 = vmatpush.bf16.msra.mxu0 %v286
    %628 = vmatpush.bf16.msra.mxu0 %v282
    %629 = vmatpush.bf16.msra.mxu0 %v278
    %630 = vmatpush.bf16.msra.mxu0 %v274
    %631 = vmatpush.bf16.msra.mxu0 %v270
    %632 = vmatpush.bf16.msra.mxu0 %v266
    %633 = vmatpush.bf16.msra.mxu0 %v262
    %634 = vmatmul.bf16.gmra.mxu0 %v586
    %v635 = vpop.f32.mrf.mxu0
    %v636 = vadd.f32 0.0, %v635
    %v637 = vpop.f32.mrf.mxu0
    %638 = vdwg.mxu0
    %v639 = vadd.f32 %v582, %v597
    %v640 = vadd.f32 %v583, %v610
    %v641 = vadd.f32 %v584, %v623
    %v642 = vadd.f32 %v585, %v636
    %v643 = vxor.u32 %v639, 2147483648
    %v644 = vxor.u32 %v640, 2147483648
    %v645 = vmul.f32 %v643, 1.442695
    %v646 = vpow.pop %v645
    %v647 = vmul.f32 %v644, 1.442695
    %v648 = vpow.pop %v647
    %v649 = vadd.f32 %v646, 1.0
    %v650 = vadd.f32 %v648, 1.0
    %v651 = vrcp.pop %v649
    %v652 = vmul.f32 %v649, %v651
    %v653 = vsub.f32 1.0, %v652
    %v654 = vmul.f32 %v651, %v653
    %v655 = vadd.f32 %v651, %v654
    %vm656 = vweird.f32 %v649
    %vm657 = vweird.f32 %v651
    %vm658 = vmor %vm656, %vm657
    %v659 = vsel %vm658, %v651, %v655
    %v660 = vand.u32 2147483647, %v649
    %vm661 = vcmp.eq.f32.partialorder %v660, 8.507059e+37
    %v662 = vand.u32 %v649, 2147483648
    %v663 = vor.u32 1.1754944e-38, %v662
    %v664 = vsel %vm661, %v663, %v659
    %v665 = vmul.f32 1.0, %v664
    %v666 = vrcp.pop %v650
    %v667 = vmul.f32 %v650, %v666
    %v668 = vsub.f32 1.0, %v667
    %v669 = vmul.f32 %v666, %v668
    %v670 = vadd.f32 %v666, %v669
    %vm671 = vweird.f32 %v650
    %vm672 = vweird.f32 %v666
    %vm673 = vmor %vm671, %vm672
    %v674 = vsel %vm673, %v666, %v670
    %v675 = vand.u32 2147483647, %v650
    %vm676 = vcmp.eq.f32.partialorder %v675, 8.507059e+37
    %v677 = vand.u32 %v650, 2147483648
    %v678 = vor.u32 1.1754944e-38, %v677
    %v679 = vsel %vm676, %v678, %v674
    %v680 = vmul.f32 1.0, %v679
    %v681 = vtanh.pop %v641
    %v682 = vxor.u32 %v642, 2147483648
    %v683 = vmul.f32 %v682, 1.442695
    %v684 = vpow.pop %v683
    %v685 = vadd.f32 %v684, 1.0
    %v686 = vrcp.pop %v685
    %v687 = vmul.f32 %v685, %v686
    %v688 = vsub.f32 1.0, %v687
    %v689 = vmul.f32 %v686, %v688
    %v690 = vadd.f32 %v686, %v689
    %vm691 = vweird.f32 %v685
    %vm692 = vweird.f32 %v686
    %vm693 = vmor %vm691, %vm692
    %v694 = vsel %vm693, %v686, %v690
    %v695 = vand.u32 2147483647, %v685
    %vm696 = vcmp.eq.f32.partialorder %v695, 8.507059e+37
    %v697 = vand.u32 %v685, 2147483648
    %v698 = vor.u32 1.1754944e-38, %v697
    %v699 = vsel %vm696, %v698, %v694
    %v700 = vmul.f32 1.0, %v699
    %v701 = vmul.f32 %v680, %v571
    %v702 = vmul.f32 %v665, %v681
    %v703 = vadd.f32 %v701, %v702
    %v704 = vtanh.pop %v703
    %v705 = vmul.f32 %v700, %v704
    %706 = vset.pattern.permute.xlu0 3
    %707 = vperm.xlu0 %706, %v97
    %v708 = vpop.permute.xlu0 %707
    %v710 = vmul.f32 %v708, %v138
    %v711 = vmul.f32 %v708, %v139
    %v712 = vmul.f32 %v708, %v140
    %v713 = vmul.f32 %v708, %v141
    %v714 = vadd.f32 %v710, %v151
    %v715 = vadd.f32 %v711, %v152
    %v716 = vadd.f32 %v712, %v153
    %v717 = vadd.f32 %v713, %v154
    %v718 = vpack.c.bf16 %v705, %v705
    %719 = vmatpush.bf16.msra.mxu0 %v287
    %720 = vmatpush.bf16.msra.mxu0 %v283
    %721 = vmatpush.bf16.msra.mxu0 %v279
    %722 = vmatpush.bf16.msra.mxu0 %v275
    %723 = vmatpush.bf16.msra.mxu0 %v271
    %724 = vmatpush.bf16.msra.mxu0 %v267
    %725 = vmatpush.bf16.msra.mxu0 %v263
    %726 = vmatpush.bf16.msra.mxu0 %v259
    %727 = vmatmul.bf16.gmra.mxu0 %v718
    %v728 = vpop.f32.mrf.mxu0
    %v729 = vadd.f32 0.0, %v728
    %v730 = vpop.f32.mrf.mxu0
    %731 = vdwg.mxu0
    %732 = vmatpush.bf16.msra.mxu0 %v288
    %733 = vmatpush.bf16.msra.mxu0 %v284
    %734 = vmatpush.bf16.msra.mxu0 %v280
    %735 = vmatpush.bf16.msra.mxu0 %v276
    %736 = vmatpush.bf16.msra.mxu0 %v272
    %737 = vmatpush.bf16.msra.mxu0 %v268
    %738 = vmatpush.bf16.msra.mxu0 %v264
    %739 = vmatpush.bf16.msra.mxu0 %v260
    %740 = vmatmul.bf16.gmra.mxu0 %v718
    %v741 = vpop.f32.mrf.mxu0
    %v742 = vadd.f32 0.0, %v741
    %v743 = vpop.f32.mrf.mxu0
    %744 = vdwg.mxu0
    %745 = vmatpush.bf16.msra.mxu0 %v289
    %746 = vmatpush.bf16.msra.mxu0 %v285
    %747 = vmatpush.bf16.msra.mxu0 %v281
    %748 = vmatpush.bf16.msra.mxu0 %v277
    %749 = vmatpush.bf16.msra.mxu0 %v273
    %750 = vmatpush.bf16.msra.mxu0 %v269
    %751 = vmatpush.bf16.msra.mxu0 %v265
    %752 = vmatpush.bf16.msra.mxu0 %v261
    %753 = vmatmul.bf16.gmra.mxu0 %v718
    %v754 = vpop.f32.mrf.mxu0
    %v755 = vadd.f32 0.0, %v754
    %v756 = vpop.f32.mrf.mxu0
    %757 = vdwg.mxu0
    %758 = vmatpush.bf16.msra.mxu0 %v290
    %759 = vmatpush.bf16.msra.mxu0 %v286
    %760 = vmatpush.bf16.msra.mxu0 %v282
    %761 = vmatpush.bf16.msra.mxu0 %v278
    %762 = vmatpush.bf16.msra.mxu0 %v274
    %763 = vmatpush.bf16.msra.mxu0 %v270
    %764 = vmatpush.bf16.msra.mxu0 %v266
    %765 = vmatpush.bf16.msra.mxu0 %v262
    %766 = vmatmul.bf16.gmra.mxu0 %v718
    %v767 = vpop.f32.mrf.mxu0
    %v768 = vadd.f32 0.0, %v767
    %v769 = vpop.f32.mrf.mxu0
    %770 = vdwg.mxu0
    %v771 = vadd.f32 %v714, %v729
    %v772 = vadd.f32 %v715, %v742
    %v773 = vadd.f32 %v716, %v755
    %v774 = vadd.f32 %v717, %v768
    %v775 = vxor.u32 %v771, 2147483648
    %v776 = vxor.u32 %v772, 2147483648
    %v777 = vmul.f32 %v775, 1.442695
    %v778 = vpow.pop %v777
    %v779 = vmul.f32 %v776, 1.442695
    %v780 = vpow.pop %v779
    %v781 = vadd.f32 %v778, 1.0
    %v782 = vadd.f32 %v780, 1.0
    %v783 = vrcp.pop %v781
    %v784 = vmul.f32 %v781, %v783
    %v785 = vsub.f32 1.0, %v784
    %v786 = vmul.f32 %v783, %v785
    %v787 = vadd.f32 %v783, %v786
    %vm788 = vweird.f32 %v781
    %vm789 = vweird.f32 %v783
    %vm790 = vmor %vm788, %vm789
    %v791 = vsel %vm790, %v783, %v787
    %v792 = vand.u32 2147483647, %v781
    %vm793 = vcmp.eq.f32.partialorder %v792, 8.507059e+37
    %v794 = vand.u32 %v781, 2147483648
    %v795 = vor.u32 1.1754944e-38, %v794
    %v796 = vsel %vm793, %v795, %v791
    %v797 = vmul.f32 1.0, %v796
    %v798 = vrcp.pop %v782
    %v799 = vmul.f32 %v782, %v798
    %v800 = vsub.f32 1.0, %v799
    %v801 = vmul.f32 %v798, %v800
    %v802 = vadd.f32 %v798, %v801
    %vm803 = vweird.f32 %v782
    %vm804 = vweird.f32 %v798
    %vm805 = vmor %vm803, %vm804
    %v806 = vsel %vm805, %v798, %v802
    %v807 = vand.u32 2147483647, %v782
    %vm808 = vcmp.eq.f32.partialorder %v807, 8.507059e+37
    %v809 = vand.u32 %v782, 2147483648
    %v810 = vor.u32 1.1754944e-38, %v809
    %v811 = vsel %vm808, %v810, %v806
    %v812 = vmul.f32 1.0, %v811
    %v813 = vtanh.pop %v773
    %v814 = vxor.u32 %v774, 2147483648
    %v815 = vmul.f32 %v814, 1.442695
    %v816 = vpow.pop %v815
    %v817 = vadd.f32 %v816, 1.0
    %v818 = vrcp.pop %v817
    %v819 = vmul.f32 %v817, %v818
    %v820 = vsub.f32 1.0, %v819
    %v821 = vmul.f32 %v818, %v820
    %v822 = vadd.f32 %v818, %v821
    %vm823 = vweird.f32 %v817
    %vm824 = vweird.f32 %v818
    %vm825 = vmor %vm823, %vm824
    %v826 = vsel %vm825, %v818, %v822
    %v827 = vand.u32 2147483647, %v817
    %vm828 = vcmp.eq.f32.partialorder %v827, 8.507059e+37
    %v829 = vand.u32 %v817, 2147483648
    %v830 = vor.u32 1.1754944e-38, %v829
    %v831 = vsel %vm828, %v830, %v826
    %v832 = vmul.f32 1.0, %v831
    %v833 = vmul.f32 %v812, %v703
    %v834 = vmul.f32 %v797, %v813
    %v835 = vadd.f32 %v833, %v834
    %v836 = vtanh.pop %v835
    %v837 = vmul.f32 %v832, %v836
    %838 = vset.pattern.permute.xlu0 4
    %839 = vperm.xlu0 %838, %v97
    %v840 = vpop.permute.xlu0 %839
    %v842 = vmul.f32 %v840, %v138
    %v843 = vmul.f32 %v840, %v139
    %v844 = vmul.f32 %v840, %v140
    %v845 = vmul.f32 %v840, %v141
    %v846 = vadd.f32 %v842, %v151
    %v847 = vadd.f32 %v843, %v152
    %v848 = vadd.f32 %v844, %v153
    %v849 = vadd.f32 %v845, %v154
    %v850 = vpack.c.bf16 %v837, %v837
    %851 = vmatpush.bf16.msra.mxu0 %v287
    %852 = vmatpush.bf16.msra.mxu0 %v283
    %853 = vmatpush.bf16.msra.mxu0 %v279
    %854 = vmatpush.bf16.msra.mxu0 %v275
    %855 = vmatpush.bf16.msra.mxu0 %v271
    %856 = vmatpush.bf16.msra.mxu0 %v267
    %857 = vmatpush.bf16.msra.mxu0 %v263
    %858 = vmatpush.bf16.msra.mxu0 %v259
    %859 = vmatmul.bf16.gmra.mxu0 %v850
    %v860 = vpop.f32.mrf.mxu0
    %v861 = vadd.f32 0.0, %v860
    %v862 = vpop.f32.mrf.mxu0
    %863 = vdwg.mxu0
    %864 = vmatpush.bf16.msra.mxu0 %v288
    %865 = vmatpush.bf16.msra.mxu0 %v284
    %866 = vmatpush.bf16.msra.mxu0 %v280
    %867 = vmatpush.bf16.msra.mxu0 %v276
    %868 = vmatpush.bf16.msra.mxu0 %v272
    %869 = vmatpush.bf16.msra.mxu0 %v268
    %870 = vmatpush.bf16.msra.mxu0 %v264
    %871 = vmatpush.bf16.msra.mxu0 %v260
    %872 = vmatmul.bf16.gmra.mxu0 %v850
    %v873 = vpop.f32.mrf.mxu0
    %v874 = vadd.f32 0.0, %v873
    %v875 = vpop.f32.mrf.mxu0
    %876 = vdwg.mxu0
    %877 = vmatpush.bf16.msra.mxu0 %v289
    %878 = vmatpush.bf16.msra.mxu0 %v285
    %879 = vmatpush.bf16.msra.mxu0 %v281
    %880 = vmatpush.bf16.msra.mxu0 %v277
    %881 = vmatpush.bf16.msra.mxu0 %v273
    %882 = vmatpush.bf16.msra.mxu0 %v269
    %883 = vmatpush.bf16.msra.mxu0 %v265
    %884 = vmatpush.bf16.msra.mxu0 %v261
    %885 = vmatmul.bf16.gmra.mxu0 %v850
    %v886 = vpop.f32.mrf.mxu0
    %v887 = vadd.f32 0.0, %v886
    %v888 = vpop.f32.mrf.mxu0
    %889 = vdwg.mxu0
    %890 = vmatpush.bf16.msra.mxu0 %v290
    %891 = vmatpush.bf16.msra.mxu0 %v286
    %892 = vmatpush.bf16.msra.mxu0 %v282
    %893 = vmatpush.bf16.msra.mxu0 %v278
    %894 = vmatpush.bf16.msra.mxu0 %v274
    %895 = vmatpush.bf16.msra.mxu0 %v270
    %896 = vmatpush.bf16.msra.mxu0 %v266
    %897 = vmatpush.bf16.msra.mxu0 %v262
    %898 = vmatmul.bf16.gmra.mxu0 %v850
    %v899 = vpop.f32.mrf.mxu0
    %v900 = vadd.f32 0.0, %v899
    %v901 = vpop.f32.mrf.mxu0
    %902 = vdwg.mxu0
    %v903 = vadd.f32 %v846, %v861
    %v904 = vadd.f32 %v847, %v874
    %v905 = vadd.f32 %v848, %v887
    %v906 = vadd.f32 %v849, %v900
    %v907 = vxor.u32 %v903, 2147483648
    %v908 = vxor.u32 %v904, 2147483648
    %v909 = vmul.f32 %v907, 1.442695
    %v910 = vpow.pop %v909
    %v911 = vmul.f32 %v908, 1.442695
    %v912 = vpow.pop %v911
    %v913 = vadd.f32 %v910, 1.0
    %v914 = vadd.f32 %v912, 1.0
    %v915 = vrcp.pop %v913
    %v916 = vmul.f32 %v913, %v915
    %v917 = vsub.f32 1.0, %v916
    %v918 = vmul.f32 %v915, %v917
    %v919 = vadd.f32 %v915, %v918
    %vm920 = vweird.f32 %v913
    %vm921 = vweird.f32 %v915
    %vm922 = vmor %vm920, %vm921
    %v923 = vsel %vm922, %v915, %v919
    %v924 = vand.u32 2147483647, %v913
    %vm925 = vcmp.eq.f32.partialorder %v924, 8.507059e+37
    %v926 = vand.u32 %v913, 2147483648
    %v927 = vor.u32 1.1754944e-38, %v926
    %v928 = vsel %vm925, %v927, %v923
    %v929 = vmul.f32 1.0, %v928
    %v930 = vrcp.pop %v914
    %v931 = vmul.f32 %v914, %v930
    %v932 = vsub.f32 1.0, %v931
    %v933 = vmul.f32 %v930, %v932
    %v934 = vadd.f32 %v930, %v933
    %vm935 = vweird.f32 %v914
    %vm936 = vweird.f32 %v930
    %vm937 = vmor %vm935, %vm936
    %v938 = vsel %vm937, %v930, %v934
    %v939 = vand.u32 2147483647, %v914
    %vm940 = vcmp.eq.f32.partialorder %v939, 8.507059e+37
    %v941 = vand.u32 %v914, 2147483648
    %v942 = vor.u32 1.1754944e-38, %v941
    %v943 = vsel %vm940, %v942, %v938
    %v944 = vmul.f32 1.0, %v943
    %v945 = vtanh.pop %v905
    %v946 = vxor.u32 %v906, 2147483648
    %v947 = vmul.f32 %v946, 1.442695
    %v948 = vpow.pop %v947
    %v949 = vadd.f32 %v948, 1.0
    %v950 = vrcp.pop %v949
    %v951 = vmul.f32 %v949, %v950
    %v952 = vsub.f32 1.0, %v951
    %v953 = vmul.f32 %v950, %v952
    %v954 = vadd.f32 %v950, %v953
    %vm955 = vweird.f32 %v949
    %vm956 = vweird.f32 %v950
    %vm957 = vmor %vm955, %vm956
    %v958 = vsel %vm957, %v950, %v954
    %v959 = vand.u32 2147483647, %v949
    %vm960 = vcmp.eq.f32.partialorder %v959, 8.507059e+37
    %v961 = vand.u32 %v949, 2147483648
    %v962 = vor.u32 1.1754944e-38, %v961
    %v963 = vsel %vm960, %v962, %v958
    %v964 = vmul.f32 1.0, %v963
    %v965 = vmul.f32 %v944, %v835
    %v966 = vmul.f32 %v929, %v945
    %v967 = vadd.f32 %v965, %v966
    %v968 = vtanh.pop %v967
    %v969 = vmul.f32 %v964, %v968
    %970 = vset.pattern.permute.xlu0 5
    %971 = vperm.xlu0 %970, %v97
    %v972 = vpop.permute.xlu0 %971
    %v974 = vmul.f32 %v972, %v138
    %v975 = vmul.f32 %v972, %v139
    %v976 = vmul.f32 %v972, %v140
    %v977 = vmul.f32 %v972, %v141
    %v978 = vadd.f32 %v974, %v151
    %v979 = vadd.f32 %v975, %v152
    %v980 = vadd.f32 %v976, %v153
    %v981 = vadd.f32 %v977, %v154
    %v982 = vpack.c.bf16 %v969, %v969
    %983 = vmatpush.bf16.msra.mxu0 %v287
    %984 = vmatpush.bf16.msra.mxu0 %v283
    %985 = vmatpush.bf16.msra.mxu0 %v279
    %986 = vmatpush.bf16.msra.mxu0 %v275
    %987 = vmatpush.bf16.msra.mxu0 %v271
    %988 = vmatpush.bf16.msra.mxu0 %v267
    %989 = vmatpush.bf16.msra.mxu0 %v263
    %990 = vmatpush.bf16.msra.mxu0 %v259
    %991 = vmatmul.bf16.gmra.mxu0 %v982
    %v992 = vpop.f32.mrf.mxu0
    %v993 = vadd.f32 0.0, %v992
    %v994 = vpop.f32.mrf.mxu0
    %995 = vdwg.mxu0
    %996 = vmatpush.bf16.msra.mxu0 %v288
    %997 = vmatpush.bf16.msra.mxu0 %v284
    %998 = vmatpush.bf16.msra.mxu0 %v280
    %999 = vmatpush.bf16.msra.mxu0 %v276
    %1000 = vmatpush.bf16.msra.mxu0 %v272
    %1001 = vmatpush.bf16.msra.mxu0 %v268
    %1002 = vmatpush.bf16.msra.mxu0 %v264
    %1003 = vmatpush.bf16.msra.mxu0 %v260
    %1004 = vmatmul.bf16.gmra.mxu0 %v982
    %v1005 = vpop.f32.mrf.mxu0
    %v1006 = vadd.f32 0.0, %v1005
    %v1007 = vpop.f32.mrf.mxu0
    %1008 = vdwg.mxu0
    %1009 = vmatpush.bf16.msra.mxu0 %v289
    %1010 = vmatpush.bf16.msra.mxu0 %v285
    %1011 = vmatpush.bf16.msra.mxu0 %v281
    %1012 = vmatpush.bf16.msra.mxu0 %v277
    %1013 = vmatpush.bf16.msra.mxu0 %v273
    %1014 = vmatpush.bf16.msra.mxu0 %v269
    %1015 = vmatpush.bf16.msra.mxu0 %v265
    %1016 = vmatpush.bf16.msra.mxu0 %v261
    %1017 = vmatmul.bf16.gmra.mxu0 %v982
    %v1018 = vpop.f32.mrf.mxu0
    %v1019 = vadd.f32 0.0, %v1018
    %v1020 = vpop.f32.mrf.mxu0
    %1021 = vdwg.mxu0
    %1022 = vmatpush.bf16.msra.mxu0 %v290
    %1023 = vmatpush.bf16.msra.mxu0 %v286
    %1024 = vmatpush.bf16.msra.mxu0 %v282
    %1025 = vmatpush.bf16.msra.mxu0 %v278
    %1026 = vmatpush.bf16.msra.mxu0 %v274
    %1027 = vmatpush.bf16.msra.mxu0 %v270
    %1028 = vmatpush.bf16.msra.mxu0 %v266
    %1029 = vmatpush.bf16.msra.mxu0 %v262
    %1030 = vmatmul.bf16.gmra.mxu0 %v982
    %v1031 = vpop.f32.mrf.mxu0
    %v1032 = vadd.f32 0.0, %v1031
    %v1033 = vpop.f32.mrf.mxu0
    %1034 = vdwg.mxu0
    %v1035 = vadd.f32 %v978, %v993
    %v1036 = vadd.f32 %v979, %v1006
    %v1037 = vadd.f32 %v980, %v1019
    %v1038 = vadd.f32 %v981, %v1032
    %v1039 = vxor.u32 %v1035, 2147483648
    %v1040 = vxor.u32 %v1036, 2147483648
    %v1041 = vmul.f32 %v1039, 1.442695
    %v1042 = vpow.pop %v1041
    %v1043 = vmul.f32 %v1040, 1.442695
    %v1044 = vpow.pop %v1043
    %v1045 = vadd.f32 %v1042, 1.0
    %v1046 = vadd.f32 %v1044, 1.0
    %v1047 = vrcp.pop %v1045
    %v1048 = vmul.f32 %v1045, %v1047
    %v1049 = vsub.f32 1.0, %v1048
    %v1050 = vmul.f32 %v1047, %v1049
    %v1051 = vadd.f32 %v1047, %v1050
    %vm1052 = vweird.f32 %v1045
    %vm1053 = vweird.f32 %v1047
    %vm1054 = vmor %vm1052, %vm1053
    %v1055 = vsel %vm1054, %v1047, %v1051
    %v1056 = vand.u32 2147483647, %v1045
    %vm1057 = vcmp.eq.f32.partialorder %v1056, 8.507059e+37
    %v1058 = vand.u32 %v1045, 2147483648
    %v1059 = vor.u32 1.1754944e-38, %v1058
    %v1060 = vsel %vm1057, %v1059, %v1055
    %v1061 = vmul.f32 1.0, %v1060
    %v1062 = vrcp.pop %v1046
    %v1063 = vmul.f32 %v1046, %v1062
    %v1064 = vsub.f32 1.0, %v1063
    %v1065 = vmul.f32 %v1062, %v1064
    %v1066 = vadd.f32 %v1062, %v1065
    %vm1067 = vweird.f32 %v1046
    %vm1068 = vweird.f32 %v1062
    %vm1069 = vmor %vm1067, %vm1068
    %v1070 = vsel %vm1069, %v1062, %v1066
    %v1071 = vand.u32 2147483647, %v1046
    %vm1072 = vcmp.eq.f32.partialorder %v1071, 8.507059e+37
    %v1073 = vand.u32 %v1046, 2147483648
    %v1074 = vor.u32 1.1754944e-38, %v1073
    %v1075 = vsel %vm1072, %v1074, %v1070
    %v1076 = vmul.f32 1.0, %v1075
    %v1077 = vtanh.pop %v1037
    %v1078 = vxor.u32 %v1038, 2147483648
    %v1079 = vmul.f32 %v1078, 1.442695
    %v1080 = vpow.pop %v1079
    %v1081 = vadd.f32 %v1080, 1.0
    %v1082 = vrcp.pop %v1081
    %v1083 = vmul.f32 %v1081, %v1082
    %v1084 = vsub.f32 1.0, %v1083
    %v1085 = vmul.f32 %v1082, %v1084
    %v1086 = vadd.f32 %v1082, %v1085
    %vm1087 = vweird.f32 %v1081
    %vm1088 = vweird.f32 %v1082
    %vm1089 = vmor %vm1087, %vm1088
    %v1090 = vsel %vm1089, %v1082, %v1086
    %v1091 = vand.u32 2147483647, %v1081
    %vm1092 = vcmp.eq.f32.partialorder %v1091, 8.507059e+37
    %v1093 = vand.u32 %v1081, 2147483648
    %v1094 = vor.u32 1.1754944e-38, %v1093
    %v1095 = vsel %vm1092, %v1094, %v1090
    %v1096 = vmul.f32 1.0, %v1095
    %v1097 = vmul.f32 %v1076, %v967
    %v1098 = vmul.f32 %v1061, %v1077
    %v1099 = vadd.f32 %v1097, %v1098
    %v1100 = vtanh.pop %v1099
    %v1101 = vmul.f32 %v1096, %v1100
    %1102 = vset.pattern.permute.xlu0 6
    %1103 = vperm.xlu0 %1102, %v97
    %v1104 = vpop.permute.xlu0 %1103
    %v1106 = vmul.f32 %v1104, %v138
    %v1107 = vmul.f32 %v1104, %v139
    %v1108 = vmul.f32 %v1104, %v140
    %v1109 = vmul.f32 %v1104, %v141
    %v1110 = vadd.f32 %v1106, %v151
    %v1111 = vadd.f32 %v1107, %v152
    %v1112 = vadd.f32 %v1108, %v153
    %v1113 = vadd.f32 %v1109, %v154
    %v1114 = vpack.c.bf16 %v1101, %v1101
    %1115 = vmatpush.bf16.msra.mxu0 %v287
    %1116 = vmatpush.bf16.msra.mxu0 %v283
    %1117 = vmatpush.bf16.msra.mxu0 %v279
    %1118 = vmatpush.bf16.msra.mxu0 %v275
    %1119 = vmatpush.bf16.msra.mxu0 %v271
    %1120 = vmatpush.bf16.msra.mxu0 %v267
    %1121 = vmatpush.bf16.msra.mxu0 %v263
    %1122 = vmatpush.bf16.msra.mxu0 %v259
    %1123 = vmatmul.bf16.gmra.mxu0 %v1114
    %v1124 = vpop.f32.mrf.mxu0
    %v1125 = vadd.f32 0.0, %v1124
    %v1126 = vpop.f32.mrf.mxu0
    %1127 = vdwg.mxu0
    %1128 = vmatpush.bf16.msra.mxu0 %v288
    %1129 = vmatpush.bf16.msra.mxu0 %v284
    %1130 = vmatpush.bf16.msra.mxu0 %v280
    %1131 = vmatpush.bf16.msra.mxu0 %v276
    %1132 = vmatpush.bf16.msra.mxu0 %v272
    %1133 = vmatpush.bf16.msra.mxu0 %v268
    %1134 = vmatpush.bf16.msra.mxu0 %v264
    %1135 = vmatpush.bf16.msra.mxu0 %v260
    %1136 = vmatmul.bf16.gmra.mxu0 %v1114
    %v1137 = vpop.f32.mrf.mxu0
    %v1138 = vadd.f32 0.0, %v1137
    %v1139 = vpop.f32.mrf.mxu0
    %1140 = vdwg.mxu0
    %1141 = vmatpush.bf16.msra.mxu0 %v289
    %1142 = vmatpush.bf16.msra.mxu0 %v285
    %1143 = vmatpush.bf16.msra.mxu0 %v281
    %1144 = vmatpush.bf16.msra.mxu0 %v277
    %1145 = vmatpush.bf16.msra.mxu0 %v273
    %1146 = vmatpush.bf16.msra.mxu0 %v269
    %1147 = vmatpush.bf16.msra.mxu0 %v265
    %1148 = vmatpush.bf16.msra.mxu0 %v261
    %1149 = vmatmul.bf16.gmra.mxu0 %v1114
    %v1150 = vpop.f32.mrf.mxu0
    %v1151 = vadd.f32 0.0, %v1150
    %v1152 = vpop.f32.mrf.mxu0
    %1153 = vdwg.mxu0
    %1154 = vmatpush.bf16.msra.mxu0 %v290
    %1155 = vmatpush.bf16.msra.mxu0 %v286
    %1156 = vmatpush.bf16.msra.mxu0 %v282
    %1157 = vmatpush.bf16.msra.mxu0 %v278
    %1158 = vmatpush.bf16.msra.mxu0 %v274
    %1159 = vmatpush.bf16.msra.mxu0 %v270
    %1160 = vmatpush.bf16.msra.mxu0 %v266
    %1161 = vmatpush.bf16.msra.mxu0 %v262
    %1162 = vmatmul.bf16.gmra.mxu0 %v1114
    %v1163 = vpop.f32.mrf.mxu0
    %v1164 = vadd.f32 0.0, %v1163
    %v1165 = vpop.f32.mrf.mxu0
    %1166 = vdwg.mxu0
    %v1167 = vadd.f32 %v1110, %v1125
    %v1168 = vadd.f32 %v1111, %v1138
    %v1169 = vadd.f32 %v1112, %v1151
    %v1170 = vadd.f32 %v1113, %v1164
    %v1171 = vxor.u32 %v1167, 2147483648
    %v1172 = vxor.u32 %v1168, 2147483648
    %v1173 = vmul.f32 %v1171, 1.442695
    %v1174 = vpow.pop %v1173
    %v1175 = vmul.f32 %v1172, 1.442695
    %v1176 = vpow.pop %v1175
    %v1177 = vadd.f32 %v1174, 1.0
    %v1178 = vadd.f32 %v1176, 1.0
    %v1179 = vrcp.pop %v1177
    %v1180 = vmul.f32 %v1177, %v1179
    %v1181 = vsub.f32 1.0, %v1180
    %v1182 = vmul.f32 %v1179, %v1181
    %v1183 = vadd.f32 %v1179, %v1182
    %vm1184 = vweird.f32 %v1177
    %vm1185 = vweird.f32 %v1179
    %vm1186 = vmor %vm1184, %vm1185
    %v1187 = vsel %vm1186, %v1179, %v1183
    %v1188 = vand.u32 2147483647, %v1177
    %vm1189 = vcmp.eq.f32.partialorder %v1188, 8.507059e+37
    %v1190 = vand.u32 %v1177, 2147483648
    %v1191 = vor.u32 1.1754944e-38, %v1190
    %v1192 = vsel %vm1189, %v1191, %v1187
    %v1193 = vmul.f32 1.0, %v1192
    %v1194 = vrcp.pop %v1178
    %v1195 = vmul.f32 %v1178, %v1194
    %v1196 = vsub.f32 1.0, %v1195
    %v1197 = vmul.f32 %v1194, %v1196
    %v1198 = vadd.f32 %v1194, %v1197
    %vm1199 = vweird.f32 %v1178
    %vm1200 = vweird.f32 %v1194
    %vm1201 = vmor %vm1199, %vm1200
    %v1202 = vsel %vm1201, %v1194, %v1198
    %v1203 = vand.u32 2147483647, %v1178
    %vm1204 = vcmp.eq.f32.partialorder %v1203, 8.507059e+37
    %v1205 = vand.u32 %v1178, 2147483648
    %v1206 = vor.u32 1.1754944e-38, %v1205
    %v1207 = vsel %vm1204, %v1206, %v1202
    %v1208 = vmul.f32 1.0, %v1207
    %v1209 = vtanh.pop %v1169
    %v1210 = vxor.u32 %v1170, 2147483648
    %v1211 = vmul.f32 %v1210, 1.442695
    %v1212 = vpow.pop %v1211
    %v1213 = vadd.f32 %v1212, 1.0
    %v1214 = vrcp.pop %v1213
    %v1215 = vmul.f32 %v1213, %v1214
    %v1216 = vsub.f32 1.0, %v1215
    %v1217 = vmul.f32 %v1214, %v1216
    %v1218 = vadd.f32 %v1214, %v1217
    %vm1219 = vweird.f32 %v1213
    %vm1220 = vweird.f32 %v1214
    %vm1221 = vmor %vm1219, %vm1220
    %v1222 = vsel %vm1221, %v1214, %v1218
    %v1223 = vand.u32 2147483647, %v1213
    %vm1224 = vcmp.eq.f32.partialorder %v1223, 8.507059e+37
    %v1225 = vand.u32 %v1213, 2147483648
    %v1226 = vor.u32 1.1754944e-38, %v1225
    %v1227 = vsel %vm1224, %v1226, %v1222
    %v1228 = vmul.f32 1.0, %v1227
    %v1229 = vmul.f32 %v1208, %v1099
    %v1230 = vmul.f32 %v1193, %v1209
    %v1231 = vadd.f32 %v1229, %v1230
    %v1232 = vtanh.pop %v1231
    %v1233 = vmul.f32 %v1228, %v1232
    %1234 = vset.pattern.permute.xlu0 7
    %1235 = vperm.xlu0 %1234, %v97
    %v1236 = vpop.permute.xlu0 %1235
    %v1238 = vmul.f32 %v1236, %v138
    %v1239 = vmul.f32 %v1236, %v139
    %v1240 = vmul.f32 %v1236, %v140
    %v1241 = vmul.f32 %v1236, %v141
    %v1242 = vadd.f32 %v1238, %v151
    %v1243 = vadd.f32 %v1239, %v152
    %v1244 = vadd.f32 %v1240, %v153
    %v1245 = vadd.f32 %v1241, %v154
    %v1246 = vpack.c.bf16 %v1233, %v1233
    %1247 = vmatpush.bf16.msra.mxu0 %v287
    %1248 = vmatpush.bf16.msra.mxu0 %v283
    %1249 = vmatpush.bf16.msra.mxu0 %v279
    %1250 = vmatpush.bf16.msra.mxu0 %v275
    %1251 = vmatpush.bf16.msra.mxu0 %v271
    %1252 = vmatpush.bf16.msra.mxu0 %v267
    %1253 = vmatpush.bf16.msra.mxu0 %v263
    %1254 = vmatpush.bf16.msra.mxu0 %v259
    %1255 = vmatmul.bf16.gmra.mxu0 %v1246
    %v1256 = vpop.f32.mrf.mxu0
    %v1257 = vadd.f32 0.0, %v1256
    %v1258 = vpop.f32.mrf.mxu0
    %1259 = vdwg.mxu0
    %1260 = vmatpush.bf16.msra.mxu0 %v288
    %1261 = vmatpush.bf16.msra.mxu0 %v284
    %1262 = vmatpush.bf16.msra.mxu0 %v280
    %1263 = vmatpush.bf16.msra.mxu0 %v276
    %1264 = vmatpush.bf16.msra.mxu0 %v272
    %1265 = vmatpush.bf16.msra.mxu0 %v268
    %1266 = vmatpush.bf16.msra.mxu0 %v264
    %1267 = vmatpush.bf16.msra.mxu0 %v260
    %1268 = vmatmul.bf16.gmra.mxu0 %v1246
    %v1269 = vpop.f32.mrf.mxu0
    %v1270 = vadd.f32 0.0, %v1269
    %v1271 = vpop.f32.mrf.mxu0
    %1272 = vdwg.mxu0
    %1273 = vmatpush.bf16.msra.mxu0 %v289
    %1274 = vmatpush.bf16.msra.mxu0 %v285
    %1275 = vmatpush.bf16.msra.mxu0 %v281
    %1276 = vmatpush.bf16.msra.mxu0 %v277
    %1277 = vmatpush.bf16.msra.mxu0 %v273
    %1278 = vmatpush.bf16.msra.mxu0 %v269
    %1279 = vmatpush.bf16.msra.mxu0 %v265
    %1280 = vmatpush.bf16.msra.mxu0 %v261
    %1281 = vmatmul.bf16.gmra.mxu0 %v1246
    %v1282 = vpop.f32.mrf.mxu0
    %v1283 = vadd.f32 0.0, %v1282
    %v1284 = vpop.f32.mrf.mxu0
    %1285 = vdwg.mxu0
    %1286 = vmatpush.bf16.msra.mxu0 %v290
    %1287 = vmatpush.bf16.msra.mxu0 %v286
    %1288 = vmatpush.bf16.msra.mxu0 %v282
    %1289 = vmatpush.bf16.msra.mxu0 %v278
    %1290 = vmatpush.bf16.msra.mxu0 %v274
    %1291 = vmatpush.bf16.msra.mxu0 %v270
    %1292 = vmatpush.bf16.msra.mxu0 %v266
    %1293 = vmatpush.bf16.msra.mxu0 %v262
    %1294 = vmatmul.bf16.gmra.mxu0 %v1246
    %v1295 = vpop.f32.mrf.mxu0
    %v1296 = vadd.f32 0.0, %v1295
    %v1297 = vpop.f32.mrf.mxu0
    %1298 = vdwg.mxu0
    %v1299 = vadd.f32 %v1242, %v1257
    %v1300 = vadd.f32 %v1243, %v1270
    %v1301 = vadd.f32 %v1244, %v1283
    %v1302 = vadd.f32 %v1245, %v1296
    %v1303 = vxor.u32 %v1299, 2147483648
    %v1304 = vxor.u32 %v1300, 2147483648
    %v1305 = vmul.f32 %v1303, 1.442695
    %v1306 = vpow.pop %v1305
    %v1307 = vmul.f32 %v1304, 1.442695
    %v1308 = vpow.pop %v1307
    %v1309 = vadd.f32 %v1306, 1.0
    %v1310 = vadd.f32 %v1308, 1.0
    %v1311 = vrcp.pop %v1309
    %v1312 = vmul.f32 %v1309, %v1311
    %v1313 = vsub.f32 1.0, %v1312
    %v1314 = vmul.f32 %v1311, %v1313
    %v1315 = vadd.f32 %v1311, %v1314
    %vm1316 = vweird.f32 %v1309
    %vm1317 = vweird.f32 %v1311
    %vm1318 = vmor %vm1316, %vm1317
    %v1319 = vsel %vm1318, %v1311, %v1315
    %v1320 = vand.u32 2147483647, %v1309
    %vm1321 = vcmp.eq.f32.partialorder %v1320, 8.507059e+37
    %v1322 = vand.u32 %v1309, 2147483648
    %v1323 = vor.u32 1.1754944e-38, %v1322
    %v1324 = vsel %vm1321, %v1323, %v1319
    %v1325 = vmul.f32 1.0, %v1324
    %v1326 = vrcp.pop %v1310
    %v1327 = vmul.f32 %v1310, %v1326
    %v1328 = vsub.f32 1.0, %v1327
    %v1329 = vmul.f32 %v1326, %v1328
    %v1330 = vadd.f32 %v1326, %v1329
    %vm1331 = vweird.f32 %v1310
    %vm1332 = vweird.f32 %v1326
    %vm1333 = vmor %vm1331, %vm1332
    %v1334 = vsel %vm1333, %v1326, %v1330
    %v1335 = vand.u32 2147483647, %v1310
    %vm1336 = vcmp.eq.f32.partialorder %v1335, 8.507059e+37
    %v1337 = vand.u32 %v1310, 2147483648
    %v1338 = vor.u32 1.1754944e-38, %v1337
    %v1339 = vsel %vm1336, %v1338, %v1334
    %v1340 = vmul.f32 1.0, %v1339
    %v1341 = vtanh.pop %v1301
    %v1342 = vxor.u32 %v1302, 2147483648
    %v1343 = vmul.f32 %v1342, 1.442695
    %v1344 = vpow.pop %v1343
    %v1345 = vadd.f32 %v1344, 1.0
    %v1346 = vrcp.pop %v1345
    %v1347 = vmul.f32 %v1345, %v1346
    %v1348 = vsub.f32 1.0, %v1347
    %v1349 = vmul.f32 %v1346, %v1348
    %v1350 = vadd.f32 %v1346, %v1349
    %vm1351 = vweird.f32 %v1345
    %vm1352 = vweird.f32 %v1346
    %vm1353 = vmor %vm1351, %vm1352
    %v1354 = vsel %vm1353, %v1346, %v1350
    %v1355 = vand.u32 2147483647, %v1345
    %vm1356 = vcmp.eq.f32.partialorder %v1355, 8.507059e+37
    %v1357 = vand.u32 %v1345, 2147483648
    %v1358 = vor.u32 1.1754944e-38, %v1357
    %v1359 = vsel %vm1356, %v1358, %v1354
    %v1360 = vmul.f32 1.0, %v1359
    %v1361 = vmul.f32 %v1340, %v1231
    %v1362 = vmul.f32 %v1325, %v1341
    %v1363 = vadd.f32 %v1361, %v1362
    %v1364 = vtanh.pop %v1363
    %v1365 = vmul.f32 %v1360, %v1364
    %v1366 = vpack.c.bf16 %v1365, %v1365
    %v1367 = vld [vmem:[#allocation10] sm:$0xf]
    %v1368 = vld [vmem:[#allocation10 + $0x4] sm:$0xf]
    %v1369 = vld [vmem:[#allocation10 + $0x8] sm:$0xf]
    %v1370 = vld [vmem:[#allocation10 + $0xc] sm:$0xf]
    %v1371 = vld [vmem:[#allocation10 + $0x10] sm:$0xf]
    %v1372 = vld [vmem:[#allocation10 + $0x14] sm:$0xf]
    %v1373 = vld [vmem:[#allocation10 + $0x18] sm:$0xf]
    %v1374 = vld [vmem:[#allocation10 + $0x1c] sm:$0xf]
    %v1375 = vld [vmem:[#allocation10 + $0x20] sm:$0xf]
    %v1376 = vld [vmem:[#allocation10 + $0x24] sm:$0xf]
    %v1377 = vld [vmem:[#allocation10 + $0x28] sm:$0xf]
    %v1378 = vld [vmem:[#allocation10 + $0x2c] sm:$0xf]
    %v1379 = vld [vmem:[#allocation10 + $0x30] sm:$0xf]
    %v1380 = vld [vmem:[#allocation10 + $0x34] sm:$0xf]
    %v1381 = vld [vmem:[#allocation10 + $0x38] sm:$0xf]
    %v1382 = vld [vmem:[#allocation10 + $0x3c] sm:$0xf]
    %v1383 = vld [vmem:[%s5] sm:$0x1]
    %v1385 = vperm.slane %v1383, 0
    %v1403 = vunpack.c.l.b16 %v1367
    %v1404 = vunpack.c.l.b16 %v1368
    %v1405 = vunpack.c.l.b16 %v1369
    %v1406 = vunpack.c.l.b16 %v1370
    %v1407 = vunpack.c.l.b16 %v1371
    %v1408 = vunpack.c.l.b16 %v1372
    %v1409 = vunpack.c.l.b16 %v1373
    %v1410 = vunpack.c.l.b16 %v1374
    %v1411 = vunpack.c.l.b16 %v1375
    %v1412 = vunpack.c.l.b16 %v1376
    %v1413 = vunpack.c.l.b16 %v1377
    %v1414 = vunpack.c.l.b16 %v1378
    %v1415 = vunpack.c.l.b16 %v1379
    %v1416 = vunpack.c.l.b16 %v1380
    %v1417 = vunpack.c.l.b16 %v1381
    %v1418 = vunpack.c.l.b16 %v1382
    %v1419 = vpack.c.b16 %v1404, %v1403
    %v1420 = vpack.c.b16 %v1406, %v1405
    %v1421 = vpack.c.b16 %v1408, %v1407
    %v1422 = vpack.c.b16 %v1410, %v1409
    %v1423 = vpack.c.b16 %v1412, %v1411
    %v1424 = vpack.c.b16 %v1414, %v1413
    %v1425 = vpack.c.b16 %v1416, %v1415
    %v1426 = vpack.c.b16 %v1418, %v1417
    %1435 = vmatpush.bf16.msra.mxu0 %v1426
    %1436 = vmatpush.bf16.msra.mxu0 %v1425
    %1437 = vmatpush.bf16.msra.mxu0 %v1424
    %1438 = vmatpush.bf16.msra.mxu0 %v1423
    %1439 = vmatpush.bf16.msra.mxu0 %v1422
    %1440 = vmatpush.bf16.msra.mxu0 %v1421
    %1441 = vmatpush.bf16.msra.mxu0 %v1420
    %1442 = vmatpush.bf16.msra.mxu0 %v1419
    %1443 = vmatmul.bf16.gmra.mxu0 %v1366
    %v1444 = vpop.f32.mrf.mxu0
    %v1445 = vadd.f32 %v1385, %v1444
    %v1446 = vpop.f32.mrf.mxu0
    %1447 = vdwg.mxu0
    %1448 = vst [vmem:[#allocation11] sm:$0xff] %v1445
    // Predicated region
    $region46: #{tpu_custom_call.1} parent=1 // pred_check
      _
    $region47: #{tpu_custom_call.1} parent=1 // pred_check_branch
      %1450 = sbr.rel (0) target = $region49
    $region48: #{tpu_custom_call.1} parent=1 // pred_region
      %1452 = vsyncadd [#allocation4], 0
      %s1454 = sshll.u32 [#allocation11], 4
      %s1455 = int_to_ptr.vmem [resolvable:$true] %s1454
      %s1456 = sshll.u32 %s6, 4
      %s1457 = int_to_ptr.hbm [resolvable:$true] %s1456
      %1459 = dma.vmem_to_hbm [thread:$0]  %s1455, 128, %s1457, [#allocation4]
    $region49: #{tpu_custom_call.1} parent=1 // pred_fallthru
      _
    // Predicated region
    $region50: #{tpu_custom_call.1} parent=1 // pred_check
      _
    $region51: #{tpu_custom_call.1} parent=1 // pred_check_branch
      %1461 = sbr.rel (0) target = $region53
    $region52: #{tpu_custom_call.1} parent=1 // pred_region
      %1463 = dma.done [#allocation4], 128
    $region53: #{tpu_custom_call.1} parent=1 // pred_fallthru
      _
    %1464 = vsyncpa [#allocation3], 1
    %1465 = vsyncpa [#allocation6], 1
    %1466 = vsyncpa [#allocation9], 1
    %1467 = vsyncpa [#allocation4], 1

</llo_original>
